<compile_context>
chip_gen: v7x
topology: tpu7x:2x2x1
jax: 0.10.0
libtpu: 0.0.40
codegen_flags: <defaults>
</compile_context>

<pallas_src>
import jax
import jax.numpy as jnp
from jax.experimental import pallas as pl
from jax.experimental.pallas import tpu as pltpu

D_IN = 784           # kept un-padded in HBM (block last-dim == full array dim)
# padded (in, out) dims per layer: only the small middle dims go to 128
_PAD_DIMS = [(784, 256), (256, 128), (128, 128), (128, 128), (128, 256), (256, 784)]
_ORIG_DIMS = [(784, 256), (256, 64), (64, 20), (20, 64), (64, 256), (256, 784)]


def _round_up(n, m):
    return ((n + m - 1) // m) * m


def _ae_kernel(x_ref,
               w1_ref, b1_ref, w2_ref, b2_ref, w3_ref, b3_ref,
               w4_ref, b4_ref, w5_ref, b5_ref, w6_ref, b6_ref,
               o_ref):
    """Full AE forward on one (TB, 784) bf16 batch tile.

    bf16 matmuls with f32 accumulation; bias-add / ReLU / sigmoid in f32.
    Zero-padded weight rows/cols keep the padded middle lanes at exactly 0
    through the ReLU layers, so no feature-dim slicing is needed outside.
    """
    h = x_ref[...]                                      # bf16 (TB, 784)

    # ---- encoder: 784 -> 256 -> 128(pad of 64) -> 128(pad of 20) ----
    a = jnp.dot(h, w1_ref[...], preferred_element_type=jnp.float32) + b1_ref[...]
    h = jnp.maximum(a, 0.0).astype(jnp.bfloat16)
    a = jnp.dot(h, w2_ref[...], preferred_element_type=jnp.float32) + b2_ref[...]
    h = jnp.maximum(a, 0.0).astype(jnp.bfloat16)
    a = jnp.dot(h, w3_ref[...], preferred_element_type=jnp.float32) + b3_ref[...]
    h = jnp.maximum(a, 0.0).astype(jnp.bfloat16)

    # ---- decoder: 128 -> 128 -> 256 -> 784, ReLU, ReLU, Sigmoid ----
    a = jnp.dot(h, w4_ref[...], preferred_element_type=jnp.float32) + b4_ref[...]
    h = jnp.maximum(a, 0.0).astype(jnp.bfloat16)
    a = jnp.dot(h, w5_ref[...], preferred_element_type=jnp.float32) + b5_ref[...]
    h = jnp.maximum(a, 0.0).astype(jnp.bfloat16)
    a = jnp.dot(h, w6_ref[...], preferred_element_type=jnp.float32) + b6_ref[...]
    o_ref[...] = jax.nn.sigmoid(a).astype(o_ref.dtype)  # f32 (TB, 784)


def _prep_params(params):
    """bf16 weights, f32 (1, N) biases; zero-pad only the small middle dims."""
    prepped = []
    for (w, b), (pin, pout) in zip(params, _PAD_DIMS):
        fin, fout = w.shape
        w_bf = w.astype(jnp.bfloat16)
        if (fin, fout) != (pin, pout):
            w_bf = jnp.zeros((pin, pout), jnp.bfloat16).at[:fin, :fout].set(w_bf)
        if fout != pout:
            b_f = jnp.zeros((1, pout), jnp.float32).at[0, :fout].set(
                b.astype(jnp.float32))
        else:
            b_f = b.astype(jnp.float32).reshape(1, fout)
        prepped.append((w_bf, b_f))
    return prepped


def ae_forward(x_nchw, params):
    """x_nchw: (B, 1, 28, 28) float32. Returns (B, 1, 28, 28) float32."""
    B = x_nchw.shape[0]
    # bf16 input halves the per-tile input DMA; no 784->896 lane padding.
    x2d = x_nchw.reshape(B, 784).astype(jnp.bfloat16)

    # Batch tile: pad by at most one tile; TB<=512 keeps double-buffered
    # in/out tiles well under v5e's 16 MiB scoped VMEM default, and large B
    # yields >=2 tiles so the parallel axis shards across v7x TensorCores.
    if B >= 1024:
        TB = 512
    elif B >= 256:
        TB = 256
    else:
        TB = _round_up(B, 16)
    Bp = _round_up(B, TB)
    xp = x2d if Bp == B else jnp.pad(x2d, ((0, Bp - B), (0, 0)))

    (w1, b1), (w2, b2), (w3, b3), (w4, b4), (w5, b5), (w6, b6) = _prep_params(params)
    weight_arrays = [w1, b1, w2, b2, w3, b3, w4, b4, w5, b5, w6, b6]

    num_tiles = Bp // TB

    # x / out: batch-tiled.  Weights & biases: constant block index -> resident
    # in VMEM across grid steps (no re-DMA).
    x_spec = pl.BlockSpec((TB, D_IN), lambda i: (i, 0))
    out_spec = pl.BlockSpec((TB, D_IN), lambda i: (i, 0))

    def const_spec(shape):
        return pl.BlockSpec(shape, lambda i: (0, 0))

    in_specs = [x_spec] + [const_spec(a.shape) for a in weight_arrays]

    out = pl.pallas_call(
        _ae_kernel,
        out_shape=jax.ShapeDtypeStruct((Bp, D_IN), jnp.float32),
        grid_spec=pltpu.PrefetchScalarGridSpec(
            num_scalar_prefetch=0,
            grid=(num_tiles,),
            in_specs=in_specs,
            out_specs=out_spec,
        ),
        compiler_params=pltpu.CompilerParams(
            dimension_semantics=("parallel",),
        ),
    )(xp, *weight_arrays)

    if Bp != B:
        out = out[:B]
    return out.reshape(B, 1, 28, 28)


def init_params(key):
    """Deterministic init mimicking PyTorch nn.Linear default (U(-1/sqrt(fan_in), +))."""
    params = []
    for (fan_in, fan_out) in _ORIG_DIMS:
        key, kw, kb = jax.random.split(key, 3)
        bound = 1.0 / jnp.sqrt(fan_in)
        # stored as (in, out) so the kernel computes x @ W + b
        w = jax.random.uniform(kw, (fan_in, fan_out), jnp.float32, -bound, bound)
        b = jax.random.uniform(kb, (fan_out,), jnp.float32, -bound, bound)
        params.append((w, b))
    return params


if __name__ == "__main__":
    key = jax.random.PRNGKey(0)
    key, kx = jax.random.split(key)

    B = 2
    x = jax.random.uniform(kx, (B, 1, 28, 28), jnp.float32)  # MNIST-like input
    params = init_params(key)

    y = ae_forward(x, params)
    y = jax.block_until_ready(y)

    # sanity: reference in plain JAX (f32 end-to-end)
    def ref_forward(x, params):
        h = x.reshape(x.shape[0], 784)
        (w1, b1), (w2, b2), (w3, b3), (w4, b4), (w5, b5), (w6, b6) = params
        h = jnp.maximum(h @ w1 + b1, 0.0)
        h = jnp.maximum(h @ w2 + b2, 0.0)
        h = jnp.maximum(h @ w3 + b3, 0.0)
        h = jnp.maximum(h @ w4 + b4, 0.0)
        h = jnp.maximum(h @ w5 + b5, 0.0)
        h = jax.nn.sigmoid(h @ w6 + b6)
        return h.reshape(x.shape[0], 1, 28, 28)

    y_ref = ref_forward(x, params)
    assert y.shape == (B, 1, 28, 28) and y.dtype == jnp.float32
    # bf16 weights/activations + f32 accumulation: loosened tolerance vs f32 ref
    assert jnp.allclose(y, y_ref, atol=2e-2, rtol=2e-2), (
        float(jnp.max(jnp.abs(y - y_ref))))

    print("KERNEL_OK")
</pallas_src>

<mosaic_0001>
module attributes {stable_mosaic.version = 11 : i64} {
  func.func @_ae_kernel(%arg0: i32, %arg1: memref<16x784xbf16, #tpu.memory_space<vmem>>, %arg2: memref<784x256xbf16, #tpu.memory_space<vmem>>, %arg3: memref<1x256xf32, #tpu.memory_space<vmem>>, %arg4: memref<256x128xbf16, #tpu.memory_space<vmem>>, %arg5: memref<1x128xf32, #tpu.memory_space<vmem>>, %arg6: memref<128x128xbf16, #tpu.memory_space<vmem>>, %arg7: memref<1x128xf32, #tpu.memory_space<vmem>>, %arg8: memref<128x128xbf16, #tpu.memory_space<vmem>>, %arg9: memref<1x128xf32, #tpu.memory_space<vmem>>, %arg10: memref<128x256xbf16, #tpu.memory_space<vmem>>, %arg11: memref<1x256xf32, #tpu.memory_space<vmem>>, %arg12: memref<256x784xbf16, #tpu.memory_space<vmem>>, %arg13: memref<1x784xf32, #tpu.memory_space<vmem>>, %arg14: memref<16x784xf32, #tpu.memory_space<vmem>>) attributes {dimension_semantics = [#tpu.dimension_semantics<parallel>], iteration_bounds = array<i64: 1>, scalar_prefetch = 0 : i64, scratch_operands = 0 : i64, tpu.core_type = #tpu.core_type<tc>, window_params = [{transform_indices = @transform_0, window_bounds = array<i64: 16, 784>}, {pipeline_mode = #tpu.pipeline_mode<synchronous>, transform_indices = @transform_1, window_bounds = array<i64: 784, 256>}, {pipeline_mode = #tpu.pipeline_mode<synchronous>, transform_indices = @transform_2, window_bounds = array<i64: 1, 256>}, {pipeline_mode = #tpu.pipeline_mode<synchronous>, transform_indices = @transform_3, window_bounds = array<i64: 256, 128>}, {pipeline_mode = #tpu.pipeline_mode<synchronous>, transform_indices = @transform_4, window_bounds = array<i64: 1, 128>}, {pipeline_mode = #tpu.pipeline_mode<synchronous>, transform_indices = @transform_5, window_bounds = array<i64: 128, 128>}, {pipeline_mode = #tpu.pipeline_mode<synchronous>, transform_indices = @transform_6, window_bounds = array<i64: 1, 128>}, {pipeline_mode = #tpu.pipeline_mode<synchronous>, transform_indices = @transform_7, window_bounds = array<i64: 128, 128>}, {pipeline_mode = #tpu.pipeline_mode<synchronous>, transform_indices = @transform_8, window_bounds = array<i64: 1, 128>}, {pipeline_mode = #tpu.pipeline_mode<synchronous>, transform_indices = @transform_9, window_bounds = array<i64: 128, 256>}, {pipeline_mode = #tpu.pipeline_mode<synchronous>, transform_indices = @transform_10, window_bounds = array<i64: 1, 256>}, {pipeline_mode = #tpu.pipeline_mode<synchronous>, transform_indices = @transform_11, window_bounds = array<i64: 256, 784>}, {pipeline_mode = #tpu.pipeline_mode<synchronous>, transform_indices = @transform_12, window_bounds = array<i64: 1, 784>}, {transform_indices = @transform_13, window_bounds = array<i64: 16, 784>}]} {
    %c0 = arith.constant 0 : index
    %c0_0 = arith.constant 0 : index
    %0 = vector.load %arg1[%c0, %c0_0] : memref<16x784xbf16, #tpu.memory_space<vmem>>, vector<16x784xbf16>
    %c0_1 = arith.constant 0 : index
    %c0_2 = arith.constant 0 : index
    %1 = vector.load %arg2[%c0_1, %c0_2] : memref<784x256xbf16, #tpu.memory_space<vmem>>, vector<784x256xbf16>
    %cst = arith.constant dense<0.000000e+00> : vector<16x256xf32>
    %2 = tpu.matmul %0, %1, %cst {dimension_numbers = #tpu.dot_dimension_numbers<[1], [0], [0], [1], [0, 0, 1, 1], [], []>} : vector<16x784xbf16>, vector<784x256xbf16>, vector<16x256xf32> -> vector<16x256xf32>
    %c0_3 = arith.constant 0 : index
    %c0_4 = arith.constant 0 : index
    %3 = vector.load %arg3[%c0_3, %c0_4] : memref<1x256xf32, #tpu.memory_space<vmem>>, vector<1x256xf32>
    %4 = vector.broadcast %3 : vector<1x256xf32> to vector<16x256xf32>
    %5 = arith.addf %2, %4 : vector<16x256xf32>
    %cst_5 = arith.constant 0.000000e+00 : f32
    %6 = vector.broadcast %cst_5 : f32 to vector<16x256xf32>
    %7 = arith.maximumf %5, %6 : vector<16x256xf32>
    %8 = arith.truncf %7 : vector<16x256xf32> to vector<16x256xbf16>
    %c0_6 = arith.constant 0 : index
    %c0_7 = arith.constant 0 : index
    %9 = vector.load %arg4[%c0_6, %c0_7] : memref<256x128xbf16, #tpu.memory_space<vmem>>, vector<256x128xbf16>
    %cst_8 = arith.constant dense<0.000000e+00> : vector<16x128xf32>
    %10 = tpu.matmul %8, %9, %cst_8 {dimension_numbers = #tpu.dot_dimension_numbers<[1], [0], [0], [1], [0, 0, 1, 1], [], []>} : vector<16x256xbf16>, vector<256x128xbf16>, vector<16x128xf32> -> vector<16x128xf32>
    %c0_9 = arith.constant 0 : index
    %c0_10 = arith.constant 0 : index
    %11 = vector.load %arg5[%c0_9, %c0_10] : memref<1x128xf32, #tpu.memory_space<vmem>>, vector<1x128xf32>
    %12 = vector.broadcast %11 : vector<1x128xf32> to vector<16x128xf32>
    %13 = arith.addf %10, %12 : vector<16x128xf32>
    %cst_11 = arith.constant 0.000000e+00 : f32
    %14 = vector.broadcast %cst_11 : f32 to vector<16x128xf32>
    %15 = arith.maximumf %13, %14 : vector<16x128xf32>
    %16 = arith.truncf %15 : vector<16x128xf32> to vector<16x128xbf16>
    %c0_12 = arith.constant 0 : index
    %c0_13 = arith.constant 0 : index
    %17 = vector.load %arg6[%c0_12, %c0_13] : memref<128x128xbf16, #tpu.memory_space<vmem>>, vector<128x128xbf16>
    %cst_14 = arith.constant dense<0.000000e+00> : vector<16x128xf32>
    %18 = tpu.matmul %16, %17, %cst_14 {dimension_numbers = #tpu.dot_dimension_numbers<[1], [0], [0], [1], [0, 0, 1, 1], [], []>} : vector<16x128xbf16>, vector<128x128xbf16>, vector<16x128xf32> -> vector<16x128xf32>
    %c0_15 = arith.constant 0 : index
    %c0_16 = arith.constant 0 : index
    %19 = vector.load %arg7[%c0_15, %c0_16] : memref<1x128xf32, #tpu.memory_space<vmem>>, vector<1x128xf32>
    %20 = vector.broadcast %19 : vector<1x128xf32> to vector<16x128xf32>
    %21 = arith.addf %18, %20 : vector<16x128xf32>
    %cst_17 = arith.constant 0.000000e+00 : f32
    %22 = vector.broadcast %cst_17 : f32 to vector<16x128xf32>
    %23 = arith.maximumf %21, %22 : vector<16x128xf32>
    %24 = arith.truncf %23 : vector<16x128xf32> to vector<16x128xbf16>
    %c0_18 = arith.constant 0 : index
    %c0_19 = arith.constant 0 : index
    %25 = vector.load %arg8[%c0_18, %c0_19] : memref<128x128xbf16, #tpu.memory_space<vmem>>, vector<128x128xbf16>
    %cst_20 = arith.constant dense<0.000000e+00> : vector<16x128xf32>
    %26 = tpu.matmul %24, %25, %cst_20 {dimension_numbers = #tpu.dot_dimension_numbers<[1], [0], [0], [1], [0, 0, 1, 1], [], []>} : vector<16x128xbf16>, vector<128x128xbf16>, vector<16x128xf32> -> vector<16x128xf32>
    %c0_21 = arith.constant 0 : index
    %c0_22 = arith.constant 0 : index
    %27 = vector.load %arg9[%c0_21, %c0_22] : memref<1x128xf32, #tpu.memory_space<vmem>>, vector<1x128xf32>
    %28 = vector.broadcast %27 : vector<1x128xf32> to vector<16x128xf32>
    %29 = arith.addf %26, %28 : vector<16x128xf32>
    %cst_23 = arith.constant 0.000000e+00 : f32
    %30 = vector.broadcast %cst_23 : f32 to vector<16x128xf32>
    %31 = arith.maximumf %29, %30 : vector<16x128xf32>
    %32 = arith.truncf %31 : vector<16x128xf32> to vector<16x128xbf16>
    %c0_24 = arith.constant 0 : index
    %c0_25 = arith.constant 0 : index
    %33 = vector.load %arg10[%c0_24, %c0_25] : memref<128x256xbf16, #tpu.memory_space<vmem>>, vector<128x256xbf16>
    %cst_26 = arith.constant dense<0.000000e+00> : vector<16x256xf32>
    %34 = tpu.matmul %32, %33, %cst_26 {dimension_numbers = #tpu.dot_dimension_numbers<[1], [0], [0], [1], [0, 0, 1, 1], [], []>} : vector<16x128xbf16>, vector<128x256xbf16>, vector<16x256xf32> -> vector<16x256xf32>
    %c0_27 = arith.constant 0 : index
    %c0_28 = arith.constant 0 : index
    %35 = vector.load %arg11[%c0_27, %c0_28] : memref<1x256xf32, #tpu.memory_space<vmem>>, vector<1x256xf32>
    %36 = vector.broadcast %35 : vector<1x256xf32> to vector<16x256xf32>
    %37 = arith.addf %34, %36 : vector<16x256xf32>
    %cst_29 = arith.constant 0.000000e+00 : f32
    %38 = vector.broadcast %cst_29 : f32 to vector<16x256xf32>
    %39 = arith.maximumf %37, %38 : vector<16x256xf32>
    %40 = arith.truncf %39 : vector<16x256xf32> to vector<16x256xbf16>
    %c0_30 = arith.constant 0 : index
    %c0_31 = arith.constant 0 : index
    %41 = vector.load %arg12[%c0_30, %c0_31] : memref<256x784xbf16, #tpu.memory_space<vmem>>, vector<256x784xbf16>
    %cst_32 = arith.constant dense<0.000000e+00> : vector<16x784xf32>
    %42 = tpu.matmul %40, %41, %cst_32 {dimension_numbers = #tpu.dot_dimension_numbers<[1], [0], [0], [1], [0, 0, 1, 1], [], []>} : vector<16x256xbf16>, vector<256x784xbf16>, vector<16x784xf32> -> vector<16x784xf32>
    %c0_33 = arith.constant 0 : index
    %c0_34 = arith.constant 0 : index
    %43 = vector.load %arg13[%c0_33, %c0_34] : memref<1x784xf32, #tpu.memory_space<vmem>>, vector<1x784xf32>
    %44 = vector.broadcast %43 : vector<1x784xf32> to vector<16x784xf32>
    %45 = arith.addf %42, %44 : vector<16x784xf32>
    %46 = arith.negf %45 : vector<16x784xf32>
    %47 = math.exp %46 : vector<16x784xf32>
    %cst_35 = arith.constant 1.000000e+00 : f32
    %48 = vector.broadcast %cst_35 : f32 to vector<16x784xf32>
    %49 = arith.addf %48, %47 : vector<16x784xf32>
    %50 = arith.divf %48, %49 : vector<16x784xf32>
    %c0_36 = arith.constant 0 : index
    %c0_37 = arith.constant 0 : index
    %51 = vector.load %arg14[%c0_36, %c0_37] : memref<16x784xf32, #tpu.memory_space<vmem>>, vector<16x784xf32>
    tpu.vector_store %arg14[%c0_36, %c0_37], %50 {strides = array<i32>} : memref<16x784xf32, #tpu.memory_space<vmem>>, vector<16x784xf32>,
    return
  }
  func.func @transform_0(%arg0: i32) -> (i32, i32) {
    %c0_i32 = arith.constant 0 : i32
    %c0_i32_0 = arith.constant 0 : i32
    return %arg0, %c0_i32 : i32, i32
  }
  func.func @transform_1(%arg0: i32) -> (i32, i32) {
    %c0_i32 = arith.constant 0 : i32
    %c0_i32_0 = arith.constant 0 : i32
    %c0_i32_1 = arith.constant 0 : i32
    return %c0_i32, %c0_i32_0 : i32, i32
  }
  func.func @transform_2(%arg0: i32) -> (i32, i32) {
    %c0_i32 = arith.constant 0 : i32
    %c0_i32_0 = arith.constant 0 : i32
    %c0_i32_1 = arith.constant 0 : i32
    return %c0_i32, %c0_i32_0 : i32, i32
  }
  func.func @transform_3(%arg0: i32) -> (i32, i32) {
    %c0_i32 = arith.constant 0 : i32
    %c0_i32_0 = arith.constant 0 : i32
    %c0_i32_1 = arith.constant 0 : i32
    return %c0_i32, %c0_i32_0 : i32, i32
  }
  func.func @transform_4(%arg0: i32) -> (i32, i32) {
    %c0_i32 = arith.constant 0 : i32
    %c0_i32_0 = arith.constant 0 : i32
    %c0_i32_1 = arith.constant 0 : i32
    return %c0_i32, %c0_i32_0 : i32, i32
  }
  func.func @transform_5(%arg0: i32) -> (i32, i32) {
    %c0_i32 = arith.constant 0 : i32
    %c0_i32_0 = arith.constant 0 : i32
    %c0_i32_1 = arith.constant 0 : i32
    return %c0_i32, %c0_i32_0 : i32, i32
  }
  func.func @transform_6(%arg0: i32) -> (i32, i32) {
    %c0_i32 = arith.constant 0 : i32
    %c0_i32_0 = arith.constant 0 : i32
    %c0_i32_1 = arith.constant 0 : i32
    return %c0_i32, %c0_i32_0 : i32, i32
  }
  func.func @transform_7(%arg0: i32) -> (i32, i32) {
    %c0_i32 = arith.constant 0 : i32
    %c0_i32_0 = arith.constant 0 : i32
    %c0_i32_1 = arith.constant 0 : i32
    return %c0_i32, %c0_i32_0 : i32, i32
  }
  func.func @transform_8(%arg0: i32) -> (i32, i32) {
    %c0_i32 = arith.constant 0 : i32
    %c0_i32_0 = arith.constant 0 : i32
    %c0_i32_1 = arith.constant 0 : i32
    return %c0_i32, %c0_i32_0 : i32, i32
  }
  func.func @transform_9(%arg0: i32) -> (i32, i32) {
    %c0_i32 = arith.constant 0 : i32
    %c0_i32_0 = arith.constant 0 : i32
    %c0_i32_1 = arith.constant 0 : i32
    return %c0_i32, %c0_i32_0 : i32, i32
  }
  func.func @transform_10(%arg0: i32) -> (i32, i32) {
    %c0_i32 = arith.constant 0 : i32
    %c0_i32_0 = arith.constant 0 : i32
    %c0_i32_1 = arith.constant 0 : i32
    return %c0_i32, %c0_i32_0 : i32, i32
  }
  func.func @transform_11(%arg0: i32) -> (i32, i32) {
    %c0_i32 = arith.constant 0 : i32
    %c0_i32_0 = arith.constant 0 : i32
    %c0_i32_1 = arith.constant 0 : i32
    return %c0_i32, %c0_i32_0 : i32, i32
  }
  func.func @transform_12(%arg0: i32) -> (i32, i32) {
    %c0_i32 = arith.constant 0 : i32
    %c0_i32_0 = arith.constant 0 : i32
    %c0_i32_1 = arith.constant 0 : i32
    return %c0_i32, %c0_i32_0 : i32, i32
  }
  func.func @transform_13(%arg0: i32) -> (i32, i32) {
    %c0_i32 = arith.constant 0 : i32
    %c0_i32_0 = arith.constant 0 : i32
    return %arg0, %c0_i32 : i32, i32
  }
}

</mosaic_0001>

<llo_original>
// kernel: tpu_custom_call.1
$region0: #{tpu_custom_call.1}
  #allocation0 [shape = 'u32[]', space=smem, size = 0x4, offset = 0x4, fixed_abs, tag = 'smem constant byte address 0x4 - core index']
  #allocation1 [shape = 'u32[144,128]{1,0:T(1,128)}', space=vmem, size = 0x12000, scoped, tag = 'internal scratch']
  %s0 = inlined_call_operand.vmem [shape: bf16[16,784], index: 0, kind: input, shape index: {}]
  %s1 = inlined_call_operand.vmem [shape: bf16[784,256], index: 1, kind: input, shape index: {}]
  %s2 = inlined_call_operand.vmem [shape: f32[1,256], index: 2, kind: input, shape index: {}]
  %s3 = inlined_call_operand.vmem [shape: bf16[256,128], index: 3, kind: input, shape index: {}]
  %s4 = inlined_call_operand.vmem [shape: f32[1,128], index: 4, kind: input, shape index: {}]
  %s5 = inlined_call_operand.vmem [shape: bf16[128,128], index: 5, kind: input, shape index: {}]
  %s6 = inlined_call_operand.vmem [shape: f32[1,128], index: 6, kind: input, shape index: {}]
  %s7 = inlined_call_operand.vmem [shape: bf16[128,128], index: 7, kind: input, shape index: {}]
  %s8 = inlined_call_operand.vmem [shape: f32[1,128], index: 8, kind: input, shape index: {}]
  %s9 = inlined_call_operand.vmem [shape: bf16[128,256], index: 9, kind: input, shape index: {}]
  %s10 = inlined_call_operand.vmem [shape: f32[1,256], index: 10, kind: input, shape index: {}]
  %s11 = inlined_call_operand.vmem [shape: bf16[256,784], index: 11, kind: input, shape index: {}]
  %s12 = inlined_call_operand.vmem [shape: f32[1,784], index: 12, kind: input, shape index: {}]
  %s13 = inlined_call_operand.hbm [shape: f32[16,784], index: 13, kind: output, shape index: {}]
  %s14 = sld [smem:[#allocation0]]
  $region62: #{tpu_custom_call.1} parent=0
    _
  %s16 = ssub.s32 1, %s14
  %s17 = scalar_select 0, %s16, %s14
  $region1: #{tpu_custom_call.1} parent=0
    #allocation2 [shape = 'u8[57344]{0}', space=vmem, size = 0xe000, scoped, tag = 'output window, operand 0, single buffered']
    #allocation3 [shape = 's32[1]{0}', space=sflag, size = 0x4, scoped, tag = 'scoped memory for tpu_custom_call.1']
    %18 = vsyncpa [#allocation3], 0
    // Predicated region
    $region2: #{tpu_custom_call.1} parent=1 // pred_check
      _
    $region3: #{tpu_custom_call.1} parent=1 // pred_check_branch
      %20 = sbr.rel (0) target = $region5
    $region4: #{tpu_custom_call.1} parent=1 // pred_region
      _
    $region5: #{tpu_custom_call.1} parent=1 // pred_fallthru
      _
    // Predicated region
    $region6: #{tpu_custom_call.1} parent=1 // pred_check
      _
    $region7: #{tpu_custom_call.1} parent=1 // pred_check_branch
      %22 = sbr.rel (0) target = $region9
    $region8: #{tpu_custom_call.1} parent=1 // pred_region
      _
    $region9: #{tpu_custom_call.1} parent=1 // pred_fallthru
      _
    // Predicated region
    $region10: #{tpu_custom_call.1} parent=1 // pred_check
      _
    $region11: #{tpu_custom_call.1} parent=1 // pred_check_branch
      %24 = sbr.rel (0) target = $region13
    $region12: #{tpu_custom_call.1} parent=1 // pred_region
      _
    $region13: #{tpu_custom_call.1} parent=1 // pred_fallthru
      _
    // Predicated region
    $region14: #{tpu_custom_call.1} parent=1 // pred_check
      _
    $region15: #{tpu_custom_call.1} parent=1 // pred_check_branch
      %26 = sbr.rel (0) target = $region17
    $region16: #{tpu_custom_call.1} parent=1 // pred_region
      _
    $region17: #{tpu_custom_call.1} parent=1 // pred_fallthru
      _
    // Predicated region
    $region18: #{tpu_custom_call.1} parent=1 // pred_check
      _
    $region19: #{tpu_custom_call.1} parent=1 // pred_check_branch
      %28 = sbr.rel (0) target = $region21
    $region20: #{tpu_custom_call.1} parent=1 // pred_region
      _
    $region21: #{tpu_custom_call.1} parent=1 // pred_fallthru
      _
    // Predicated region
    $region22: #{tpu_custom_call.1} parent=1 // pred_check
      _
    $region23: #{tpu_custom_call.1} parent=1 // pred_check_branch
      %30 = sbr.rel (0) target = $region25
    $region24: #{tpu_custom_call.1} parent=1 // pred_region
      _
    $region25: #{tpu_custom_call.1} parent=1 // pred_fallthru
      _
    // Predicated region
    $region26: #{tpu_custom_call.1} parent=1 // pred_check
      _
    $region27: #{tpu_custom_call.1} parent=1 // pred_check_branch
      %32 = sbr.rel (0) target = $region29
    $region28: #{tpu_custom_call.1} parent=1 // pred_region
      _
    $region29: #{tpu_custom_call.1} parent=1 // pred_fallthru
      _
    // Predicated region
    $region30: #{tpu_custom_call.1} parent=1 // pred_check
      _
    $region31: #{tpu_custom_call.1} parent=1 // pred_check_branch
      %34 = sbr.rel (0) target = $region33
    $region32: #{tpu_custom_call.1} parent=1 // pred_region
      _
    $region33: #{tpu_custom_call.1} parent=1 // pred_fallthru
      _
    // Predicated region
    $region34: #{tpu_custom_call.1} parent=1 // pred_check
      _
    $region35: #{tpu_custom_call.1} parent=1 // pred_check_branch
      %36 = sbr.rel (0) target = $region37
    $region36: #{tpu_custom_call.1} parent=1 // pred_region
      _
    $region37: #{tpu_custom_call.1} parent=1 // pred_fallthru
      _
    // Predicated region
    $region38: #{tpu_custom_call.1} parent=1 // pred_check
      _
    $region39: #{tpu_custom_call.1} parent=1 // pred_check_branch
      %38 = sbr.rel (0) target = $region41
    $region40: #{tpu_custom_call.1} parent=1 // pred_region
      _
    $region41: #{tpu_custom_call.1} parent=1 // pred_fallthru
      _
    // Predicated region
    $region42: #{tpu_custom_call.1} parent=1 // pred_check
      _
    $region43: #{tpu_custom_call.1} parent=1 // pred_check_branch
      %40 = sbr.rel (0) target = $region45
    $region44: #{tpu_custom_call.1} parent=1 // pred_region
      _
    $region45: #{tpu_custom_call.1} parent=1 // pred_fallthru
      _
    // Predicated region
    $region46: #{tpu_custom_call.1} parent=1 // pred_check
      _
    $region47: #{tpu_custom_call.1} parent=1 // pred_check_branch
      %42 = sbr.rel (0) target = $region49
    $region48: #{tpu_custom_call.1} parent=1 // pred_region
      _
    $region49: #{tpu_custom_call.1} parent=1 // pred_fallthru
      _
    // Predicated region
    $region50: #{tpu_custom_call.1} parent=1 // pred_check
      _
    $region51: #{tpu_custom_call.1} parent=1 // pred_check_branch
      %44 = sbr.rel (0) target = $region53
    $region52: #{tpu_custom_call.1} parent=1 // pred_region
      _
    $region53: #{tpu_custom_call.1} parent=1 // pred_fallthru
      _
    %v46 = vld [vmem:[%s0] sm:$0xff]
    %v47 = vld [vmem:[%s0 + $0x8] sm:$0xff]
    %v48 = vld [vmem:[%s0 + $0x10] sm:$0xff]
    %v49 = vld [vmem:[%s0 + $0x18] sm:$0xf]
    %v50 = vld [vmem:[%s0 + $0x1c] sm:$0xff]
    %v51 = vld [vmem:[%s0 + $0x24] sm:$0xff]
    %v52 = vld [vmem:[%s0 + $0x2c] sm:$0xff]
    %v53 = vld [vmem:[%s0 + $0x34] sm:$0xf]
    %v54 = vld [vmem:[%s1] sm:$0xff]
    %v55 = vld [vmem:[%s1 + $0x8] sm:$0xff]
    %v56 = vld [vmem:[%s1 + $0x10] sm:$0xff]
    %v57 = vld [vmem:[%s1 + $0x18] sm:$0xff]
    %v58 = vld [vmem:[%s1 + $0x20] sm:$0xff]
    %v59 = vld [vmem:[%s1 + $0x28] sm:$0xff]
    %v60 = vld [vmem:[%s1 + $0x30] sm:$0xff]
    %v61 = vld [vmem:[%s1 + $0x38] sm:$0xff]
    %v62 = vld [vmem:[%s1 + $0x40] sm:$0xff]
    %v63 = vld [vmem:[%s1 + $0x48] sm:$0xff]
    %v64 = vld [vmem:[%s1 + $0x50] sm:$0xff]
    %v65 = vld [vmem:[%s1 + $0x58] sm:$0xff]
    %v66 = vld [vmem:[%s1 + $0x60] sm:$0xff]
    %v67 = vld [vmem:[%s1 + $0x68] sm:$0xff]
    %v68 = vld [vmem:[%s1 + $0x70] sm:$0xff]
    %v69 = vld [vmem:[%s1 + $0x78] sm:$0xff]
    %v70 = vld [vmem:[%s1 + $0x80] sm:$0xff]
    %v71 = vld [vmem:[%s1 + $0x88] sm:$0xff]
    %v72 = vld [vmem:[%s1 + $0x90] sm:$0xff]
    %v73 = vld [vmem:[%s1 + $0x98] sm:$0xff]
    %v74 = vld [vmem:[%s1 + $0xa0] sm:$0xff]
    %v75 = vld [vmem:[%s1 + $0xa8] sm:$0xff]
    %v76 = vld [vmem:[%s1 + $0xb0] sm:$0xff]
    %v77 = vld [vmem:[%s1 + $0xb8] sm:$0xff]
    %v78 = vld [vmem:[%s1 + $0xc0] sm:$0xff]
    %v79 = vld [vmem:[%s1 + $0xc8] sm:$0xff]
    %v80 = vld [vmem:[%s1 + $0xd0] sm:$0xff]
    %v81 = vld [vmem:[%s1 + $0xd8] sm:$0xff]
    %v82 = vld [vmem:[%s1 + $0xe0] sm:$0xff]
    %v83 = vld [vmem:[%s1 + $0xe8] sm:$0xff]
    %v84 = vld [vmem:[%s1 + $0xf0] sm:$0xff]
    %v85 = vld [vmem:[%s1 + $0xf8] sm:$0xff]
    %v86 = vld [vmem:[%s1 + $0x100] sm:$0xff]
    %v87 = vld [vmem:[%s1 + $0x108] sm:$0xff]
    %v88 = vld [vmem:[%s1 + $0x110] sm:$0xff]
    %v89 = vld [vmem:[%s1 + $0x118] sm:$0xff]
    %v90 = vld [vmem:[%s1 + $0x120] sm:$0xff]
    %v91 = vld [vmem:[%s1 + $0x128] sm:$0xff]
    %v92 = vld [vmem:[%s1 + $0x130] sm:$0xff]
    %v93 = vld [vmem:[%s1 + $0x138] sm:$0xff]
    %v94 = vld [vmem:[%s1 + $0x140] sm:$0xff]
    %v95 = vld [vmem:[%s1 + $0x148] sm:$0xff]
    %v96 = vld [vmem:[%s1 + $0x150] sm:$0xff]
    %v97 = vld [vmem:[%s1 + $0x158] sm:$0xff]
    %v98 = vld [vmem:[%s1 + $0x160] sm:$0xff]
    %v99 = vld [vmem:[%s1 + $0x168] sm:$0xff]
    %v100 = vld [vmem:[%s1 + $0x170] sm:$0xff]
    %v101 = vld [vmem:[%s1 + $0x178] sm:$0xff]
    %v102 = vld [vmem:[%s1 + $0x180] sm:$0xff]
    %v103 = vld [vmem:[%s1 + $0x188] sm:$0xff]
    %v104 = vld [vmem:[%s1 + $0x190] sm:$0xff]
    %v105 = vld [vmem:[%s1 + $0x198] sm:$0xff]
    %v106 = vld [vmem:[%s1 + $0x1a0] sm:$0xff]
    %v107 = vld [vmem:[%s1 + $0x1a8] sm:$0xff]
    %v108 = vld [vmem:[%s1 + $0x1b0] sm:$0xff]
    %v109 = vld [vmem:[%s1 + $0x1b8] sm:$0xff]
    %v110 = vld [vmem:[%s1 + $0x1c0] sm:$0xff]
    %v111 = vld [vmem:[%s1 + $0x1c8] sm:$0xff]
    %v112 = vld [vmem:[%s1 + $0x1d0] sm:$0xff]
    %v113 = vld [vmem:[%s1 + $0x1d8] sm:$0xff]
    %v114 = vld [vmem:[%s1 + $0x1e0] sm:$0xff]
    %v115 = vld [vmem:[%s1 + $0x1e8] sm:$0xff]
    %v116 = vld [vmem:[%s1 + $0x1f0] sm:$0xff]
    %v117 = vld [vmem:[%s1 + $0x1f8] sm:$0xff]
    %v118 = vld [vmem:[%s1 + $0x200] sm:$0xff]
    %v119 = vld [vmem:[%s1 + $0x208] sm:$0xff]
    %v120 = vld [vmem:[%s1 + $0x210] sm:$0xff]
    %v121 = vld [vmem:[%s1 + $0x218] sm:$0xff]
    %v122 = vld [vmem:[%s1 + $0x220] sm:$0xff]
    %v123 = vld [vmem:[%s1 + $0x228] sm:$0xff]
    %v124 = vld [vmem:[%s1 + $0x230] sm:$0xff]
    %v125 = vld [vmem:[%s1 + $0x238] sm:$0xff]
    %v126 = vld [vmem:[%s1 + $0x240] sm:$0xff]
    %v127 = vld [vmem:[%s1 + $0x248] sm:$0xff]
    %v128 = vld [vmem:[%s1 + $0x250] sm:$0xff]
    %v129 = vld [vmem:[%s1 + $0x258] sm:$0xff]
    %v130 = vld [vmem:[%s1 + $0x260] sm:$0xff]
    %v131 = vld [vmem:[%s1 + $0x268] sm:$0xff]
    %v132 = vld [vmem:[%s1 + $0x270] sm:$0xff]
    %v133 = vld [vmem:[%s1 + $0x278] sm:$0xff]
    %v134 = vld [vmem:[%s1 + $0x280] sm:$0xff]
    %v135 = vld [vmem:[%s1 + $0x288] sm:$0xff]
    %v136 = vld [vmem:[%s1 + $0x290] sm:$0xff]
    %v137 = vld [vmem:[%s1 + $0x298] sm:$0xff]
    %v138 = vld [vmem:[%s1 + $0x2a0] sm:$0xff]
    %v139 = vld [vmem:[%s1 + $0x2a8] sm:$0xff]
    %v140 = vld [vmem:[%s1 + $0x2b0] sm:$0xff]
    %v141 = vld [vmem:[%s1 + $0x2b8] sm:$0xff]
    %v142 = vld [vmem:[%s1 + $0x2c0] sm:$0xff]
    %v143 = vld [vmem:[%s1 + $0x2c8] sm:$0xff]
    %v144 = vld [vmem:[%s1 + $0x2d0] sm:$0xff]
    %v145 = vld [vmem:[%s1 + $0x2d8] sm:$0xff]
    %v146 = vld [vmem:[%s1 + $0x2e0] sm:$0xff]
    %v147 = vld [vmem:[%s1 + $0x2e8] sm:$0xff]
    %v148 = vld [vmem:[%s1 + $0x2f0] sm:$0xff]
    %v149 = vld [vmem:[%s1 + $0x2f8] sm:$0xff]
    %v150 = vld [vmem:[%s1 + $0x300] sm:$0xff]
    %v151 = vld [vmem:[%s1 + $0x308] sm:$0xff]
    %v152 = vld [vmem:[%s2] sm:$0x3]
    %v154 = vlaneseq
    %v155 = vshrl.u32 %v154, 7
    %v156 = vsub.s32 0, %v155
    %v157 = vrot.slane %v152, %v156
    %v158 = vlaneseq
    %v159 = vshrl.u32 %v158, 7
    %v160 = vsub.s32 1, %v159
    %v161 = vrot.slane %v152, %v160
    %v172 = vunpack.c.l.b16 %v46
    %v173 = vunpack.c.h.b16 %v46
    %v174 = vunpack.c.l.b16 %v47
    %v175 = vunpack.c.h.b16 %v47
    %v176 = vunpack.c.l.b16 %v48
    %v177 = vunpack.c.h.b16 %v48
    %v178 = vunpack.c.l.b16 %v49
    %v179 = vunpack.c.l.b16 %v50
    %v180 = vunpack.c.h.b16 %v50
    %v181 = vunpack.c.l.b16 %v51
    %v182 = vunpack.c.h.b16 %v51
    %v183 = vunpack.c.l.b16 %v52
    %v184 = vunpack.c.h.b16 %v52
    %v185 = vunpack.c.l.b16 %v53
    %v186 = vpack.c.b16 %v179, %v172
    %v187 = vpack.c.b16 %v180, %v173
    %v188 = vpack.c.b16 %v181, %v174
    %v189 = vpack.c.b16 %v182, %v175
    %v190 = vpack.c.b16 %v183, %v176
    %v191 = vpack.c.b16 %v184, %v177
    %v192 = vpack.c.b16 %v185, %v178
    %v297 = vunpack.c.l.b16 %v54
    %v298 = vunpack.c.h.b16 %v54
    %v299 = vunpack.c.l.b16 %v55
    %v300 = vunpack.c.h.b16 %v55
    %v301 = vunpack.c.l.b16 %v56
    %v302 = vunpack.c.h.b16 %v56
    %v303 = vunpack.c.l.b16 %v57
    %v304 = vunpack.c.h.b16 %v57
    %v305 = vunpack.c.l.b16 %v58
    %v306 = vunpack.c.h.b16 %v58
    %v307 = vunpack.c.l.b16 %v59
    %v308 = vunpack.c.h.b16 %v59
    %v309 = vunpack.c.l.b16 %v60
    %v310 = vunpack.c.h.b16 %v60
    %v311 = vunpack.c.l.b16 %v61
    %v312 = vunpack.c.h.b16 %v61
    %v313 = vunpack.c.l.b16 %v62
    %v314 = vunpack.c.h.b16 %v62
    %v315 = vunpack.c.l.b16 %v63
    %v316 = vunpack.c.h.b16 %v63
    %v317 = vunpack.c.l.b16 %v64
    %v318 = vunpack.c.h.b16 %v64
    %v319 = vunpack.c.l.b16 %v65
    %v320 = vunpack.c.h.b16 %v65
    %v321 = vunpack.c.l.b16 %v66
    %v322 = vunpack.c.h.b16 %v66
    %v323 = vunpack.c.l.b16 %v67
    %v324 = vunpack.c.h.b16 %v67
    %v325 = vunpack.c.l.b16 %v68
    %v326 = vunpack.c.h.b16 %v68
    %v327 = vunpack.c.l.b16 %v69
    %v328 = vunpack.c.h.b16 %v69
    %v329 = vunpack.c.l.b16 %v70
    %v330 = vunpack.c.h.b16 %v70
    %v331 = vunpack.c.l.b16 %v71
    %v332 = vunpack.c.h.b16 %v71
    %v333 = vunpack.c.l.b16 %v72
    %v334 = vunpack.c.h.b16 %v72
    %v335 = vunpack.c.l.b16 %v73
    %v336 = vunpack.c.h.b16 %v73
    %v337 = vunpack.c.l.b16 %v74
    %v338 = vunpack.c.h.b16 %v74
    %v339 = vunpack.c.l.b16 %v75
    %v340 = vunpack.c.h.b16 %v75
    %v341 = vunpack.c.l.b16 %v76
    %v342 = vunpack.c.h.b16 %v76
    %v343 = vunpack.c.l.b16 %v77
    %v344 = vunpack.c.h.b16 %v77
    %v345 = vunpack.c.l.b16 %v78
    %v346 = vunpack.c.h.b16 %v78
    %v347 = vunpack.c.l.b16 %v79
    %v348 = vunpack.c.h.b16 %v79
    %v349 = vunpack.c.l.b16 %v80
    %v350 = vunpack.c.h.b16 %v80
    %v351 = vunpack.c.l.b16 %v81
    %v352 = vunpack.c.h.b16 %v81
    %v353 = vunpack.c.l.b16 %v82
    %v354 = vunpack.c.h.b16 %v82
    %v355 = vunpack.c.l.b16 %v83
    %v356 = vunpack.c.h.b16 %v83
    %v357 = vunpack.c.l.b16 %v84
    %v358 = vunpack.c.h.b16 %v84
    %v359 = vunpack.c.l.b16 %v85
    %v360 = vunpack.c.h.b16 %v85
    %v361 = vunpack.c.l.b16 %v86
    %v362 = vunpack.c.h.b16 %v86
    %v363 = vunpack.c.l.b16 %v87
    %v364 = vunpack.c.h.b16 %v87
    %v365 = vunpack.c.l.b16 %v88
    %v366 = vunpack.c.h.b16 %v88
    %v367 = vunpack.c.l.b16 %v89
    %v368 = vunpack.c.h.b16 %v89
    %v369 = vunpack.c.l.b16 %v90
    %v370 = vunpack.c.h.b16 %v90
    %v371 = vunpack.c.l.b16 %v91
    %v372 = vunpack.c.h.b16 %v91
    %v373 = vunpack.c.l.b16 %v92
    %v374 = vunpack.c.h.b16 %v92
    %v375 = vunpack.c.l.b16 %v93
    %v376 = vunpack.c.h.b16 %v93
    %v377 = vunpack.c.l.b16 %v94
    %v378 = vunpack.c.h.b16 %v94
    %v379 = vunpack.c.l.b16 %v95
    %v380 = vunpack.c.h.b16 %v95
    %v381 = vunpack.c.l.b16 %v96
    %v382 = vunpack.c.h.b16 %v96
    %v383 = vunpack.c.l.b16 %v97
    %v384 = vunpack.c.h.b16 %v97
    %v385 = vunpack.c.l.b16 %v98
    %v386 = vunpack.c.h.b16 %v98
    %v387 = vunpack.c.l.b16 %v99
    %v388 = vunpack.c.h.b16 %v99
    %v389 = vunpack.c.l.b16 %v100
    %v390 = vunpack.c.h.b16 %v100
    %v391 = vunpack.c.l.b16 %v101
    %v392 = vunpack.c.h.b16 %v101
    %v393 = vunpack.c.l.b16 %v102
    %v394 = vunpack.c.h.b16 %v102
    %v395 = vunpack.c.l.b16 %v103
    %v396 = vunpack.c.h.b16 %v103
    %v397 = vunpack.c.l.b16 %v104
    %v398 = vunpack.c.h.b16 %v104
    %v399 = vunpack.c.l.b16 %v105
    %v400 = vunpack.c.h.b16 %v105
    %v401 = vunpack.c.l.b16 %v106
    %v402 = vunpack.c.h.b16 %v106
    %v403 = vunpack.c.l.b16 %v107
    %v404 = vunpack.c.h.b16 %v107
    %v405 = vunpack.c.l.b16 %v108
    %v406 = vunpack.c.h.b16 %v108
    %v407 = vunpack.c.l.b16 %v109
    %v408 = vunpack.c.h.b16 %v109
    %v409 = vunpack.c.l.b16 %v110
    %v410 = vunpack.c.h.b16 %v110
    %v411 = vunpack.c.l.b16 %v111
    %v412 = vunpack.c.h.b16 %v111
    %v413 = vunpack.c.l.b16 %v112
    %v414 = vunpack.c.h.b16 %v112
    %v415 = vunpack.c.l.b16 %v113
    %v416 = vunpack.c.h.b16 %v113
    %v417 = vunpack.c.l.b16 %v114
    %v418 = vunpack.c.h.b16 %v114
    %v419 = vunpack.c.l.b16 %v115
    %v420 = vunpack.c.h.b16 %v115
    %v421 = vunpack.c.l.b16 %v116
    %v422 = vunpack.c.h.b16 %v116
    %v423 = vunpack.c.l.b16 %v117
    %v424 = vunpack.c.h.b16 %v117
    %v425 = vunpack.c.l.b16 %v118
    %v426 = vunpack.c.h.b16 %v118
    %v427 = vunpack.c.l.b16 %v119
    %v428 = vunpack.c.h.b16 %v119
    %v429 = vunpack.c.l.b16 %v120
    %v430 = vunpack.c.h.b16 %v120
    %v431 = vunpack.c.l.b16 %v121
    %v432 = vunpack.c.h.b16 %v121
    %v433 = vunpack.c.l.b16 %v122
    %v434 = vunpack.c.h.b16 %v122
    %v435 = vunpack.c.l.b16 %v123
    %v436 = vunpack.c.h.b16 %v123
    %v437 = vunpack.c.l.b16 %v124
    %v438 = vunpack.c.h.b16 %v124
    %v439 = vunpack.c.l.b16 %v125
    %v440 = vunpack.c.h.b16 %v125
    %v441 = vunpack.c.l.b16 %v126
    %v442 = vunpack.c.h.b16 %v126
    %v443 = vunpack.c.l.b16 %v127
    %v444 = vunpack.c.h.b16 %v127
    %v445 = vunpack.c.l.b16 %v128
    %v446 = vunpack.c.h.b16 %v128
    %v447 = vunpack.c.l.b16 %v129
    %v448 = vunpack.c.h.b16 %v129
    %v449 = vunpack.c.l.b16 %v130
    %v450 = vunpack.c.h.b16 %v130
    %v451 = vunpack.c.l.b16 %v131
    %v452 = vunpack.c.h.b16 %v131
    %v453 = vunpack.c.l.b16 %v132
    %v454 = vunpack.c.h.b16 %v132
    %v455 = vunpack.c.l.b16 %v133
    %v456 = vunpack.c.h.b16 %v133
    %v457 = vunpack.c.l.b16 %v134
    %v458 = vunpack.c.h.b16 %v134
    %v459 = vunpack.c.l.b16 %v135
    %v460 = vunpack.c.h.b16 %v135
    %v461 = vunpack.c.l.b16 %v136
    %v462 = vunpack.c.h.b16 %v136
    %v463 = vunpack.c.l.b16 %v137
    %v464 = vunpack.c.h.b16 %v137
    %v465 = vunpack.c.l.b16 %v138
    %v466 = vunpack.c.h.b16 %v138
    %v467 = vunpack.c.l.b16 %v139
    %v468 = vunpack.c.h.b16 %v139
    %v469 = vunpack.c.l.b16 %v140
    %v470 = vunpack.c.h.b16 %v140
    %v471 = vunpack.c.l.b16 %v141
    %v472 = vunpack.c.h.b16 %v141
    %v473 = vunpack.c.l.b16 %v142
    %v474 = vunpack.c.h.b16 %v142
    %v475 = vunpack.c.l.b16 %v143
    %v476 = vunpack.c.h.b16 %v143
    %v477 = vunpack.c.l.b16 %v144
    %v478 = vunpack.c.h.b16 %v144
    %v479 = vunpack.c.l.b16 %v145
    %v480 = vunpack.c.h.b16 %v145
    %v481 = vunpack.c.l.b16 %v146
    %v482 = vunpack.c.h.b16 %v146
    %v483 = vunpack.c.l.b16 %v147
    %v484 = vunpack.c.h.b16 %v147
    %v485 = vunpack.c.l.b16 %v148
    %v486 = vunpack.c.h.b16 %v148
    %v487 = vunpack.c.l.b16 %v149
    %v488 = vunpack.c.h.b16 %v149
    %v489 = vunpack.c.l.b16 %v150
    %v490 = vunpack.c.h.b16 %v150
    %v491 = vunpack.c.l.b16 %v151
    %v492 = vunpack.c.h.b16 %v151
    %v493 = vpack.c.b16 %v299, %v297
    %v494 = vpack.c.b16 %v300, %v298
    %v495 = vpack.c.b16 %v303, %v301
    %v496 = vpack.c.b16 %v304, %v302
    %v497 = vpack.c.b16 %v307, %v305
    %v498 = vpack.c.b16 %v308, %v306
    %v499 = vpack.c.b16 %v311, %v309
    %v500 = vpack.c.b16 %v312, %v310
    %v501 = vpack.c.b16 %v315, %v313
    %v502 = vpack.c.b16 %v316, %v314
    %v503 = vpack.c.b16 %v319, %v317
    %v504 = vpack.c.b16 %v320, %v318
    %v505 = vpack.c.b16 %v323, %v321
    %v506 = vpack.c.b16 %v324, %v322
    %v507 = vpack.c.b16 %v327, %v325
    %v508 = vpack.c.b16 %v328, %v326
    %v509 = vpack.c.b16 %v331, %v329
    %v510 = vpack.c.b16 %v332, %v330
    %v511 = vpack.c.b16 %v335, %v333
    %v512 = vpack.c.b16 %v336, %v334
    %v513 = vpack.c.b16 %v339, %v337
    %v514 = vpack.c.b16 %v340, %v338
    %v515 = vpack.c.b16 %v343, %v341
    %v516 = vpack.c.b16 %v344, %v342
    %v517 = vpack.c.b16 %v347, %v345
    %v518 = vpack.c.b16 %v348, %v346
    %v519 = vpack.c.b16 %v351, %v349
    %v520 = vpack.c.b16 %v352, %v350
    %v521 = vpack.c.b16 %v355, %v353
    %v522 = vpack.c.b16 %v356, %v354
    %v523 = vpack.c.b16 %v359, %v357
    %v524 = vpack.c.b16 %v360, %v358
    %v525 = vpack.c.b16 %v363, %v361
    %v526 = vpack.c.b16 %v364, %v362
    %v527 = vpack.c.b16 %v367, %v365
    %v528 = vpack.c.b16 %v368, %v366
    %v529 = vpack.c.b16 %v371, %v369
    %v530 = vpack.c.b16 %v372, %v370
    %v531 = vpack.c.b16 %v375, %v373
    %v532 = vpack.c.b16 %v376, %v374
    %v533 = vpack.c.b16 %v379, %v377
    %v534 = vpack.c.b16 %v380, %v378
    %v535 = vpack.c.b16 %v383, %v381
    %v536 = vpack.c.b16 %v384, %v382
    %v537 = vpack.c.b16 %v387, %v385
    %v538 = vpack.c.b16 %v388, %v386
    %v539 = vpack.c.b16 %v391, %v389
    %v540 = vpack.c.b16 %v392, %v390
    %v541 = vpack.c.b16 %v395, %v393
    %v542 = vpack.c.b16 %v396, %v394
    %v543 = vpack.c.b16 %v399, %v397
    %v544 = vpack.c.b16 %v400, %v398
    %v545 = vpack.c.b16 %v403, %v401
    %v546 = vpack.c.b16 %v404, %v402
    %v547 = vpack.c.b16 %v407, %v405
    %v548 = vpack.c.b16 %v408, %v406
    %v549 = vpack.c.b16 %v411, %v409
    %v550 = vpack.c.b16 %v412, %v410
    %v551 = vpack.c.b16 %v415, %v413
    %v552 = vpack.c.b16 %v416, %v414
    %v553 = vpack.c.b16 %v419, %v417
    %v554 = vpack.c.b16 %v420, %v418
    %v555 = vpack.c.b16 %v423, %v421
    %v556 = vpack.c.b16 %v424, %v422
    %v557 = vpack.c.b16 %v427, %v425
    %v558 = vpack.c.b16 %v428, %v426
    %v559 = vpack.c.b16 %v431, %v429
    %v560 = vpack.c.b16 %v432, %v430
    %v561 = vpack.c.b16 %v435, %v433
    %v562 = vpack.c.b16 %v436, %v434
    %v563 = vpack.c.b16 %v439, %v437
    %v564 = vpack.c.b16 %v440, %v438
    %v565 = vpack.c.b16 %v443, %v441
    %v566 = vpack.c.b16 %v444, %v442
    %v567 = vpack.c.b16 %v447, %v445
    %v568 = vpack.c.b16 %v448, %v446
    %v569 = vpack.c.b16 %v451, %v449
    %v570 = vpack.c.b16 %v452, %v450
    %v571 = vpack.c.b16 %v455, %v453
    %v572 = vpack.c.b16 %v456, %v454
    %v573 = vpack.c.b16 %v459, %v457
    %v574 = vpack.c.b16 %v460, %v458
    %v575 = vpack.c.b16 %v463, %v461
    %v576 = vpack.c.b16 %v464, %v462
    %v577 = vpack.c.b16 %v467, %v465
    %v578 = vpack.c.b16 %v468, %v466
    %v579 = vpack.c.b16 %v471, %v469
    %v580 = vpack.c.b16 %v472, %v470
    %v581 = vpack.c.b16 %v475, %v473
    %v582 = vpack.c.b16 %v476, %v474
    %v583 = vpack.c.b16 %v479, %v477
    %v584 = vpack.c.b16 %v480, %v478
    %v585 = vpack.c.b16 %v483, %v481
    %v586 = vpack.c.b16 %v484, %v482
    %v587 = vpack.c.b16 %v487, %v485
    %v588 = vpack.c.b16 %v488, %v486
    %v589 = vpack.c.b16 %v491, %v489
    %v590 = vpack.c.b16 %v492, %v490
    %vm689 = vcmask 130048
    %v691 = vsel %vm689, %v192, 0
    %693 = vmatprep.subr.bf16.mxu0 %v494
    %694 = vmatpush1.bf16.msra.mxu0 %v493
    %695 = vmatprep.subr.bf16.mxu0 %v496
    %696 = vmatpush1.bf16.msra.mxu0 %v495
    %697 = vmatprep.subr.bf16.mxu0 %v498
    %698 = vmatpush1.bf16.msra.mxu0 %v497
    %699 = vmatprep.subr.bf16.mxu0 %v500
    %700 = vmatpush1.bf16.msra.mxu0 %v499
    %701 = vmatprep.subr.bf16.mxu0 %v502
    %702 = vmatpush1.bf16.msra.mxu0 %v501
    %703 = vmatprep.subr.bf16.mxu0 %v504
    %704 = vmatpush1.bf16.msra.mxu0 %v503
    %705 = vmatprep.subr.bf16.mxu0 %v506
    %706 = vmatpush1.bf16.msra.mxu0 %v505
    %707 = vmatprep.subr.bf16.mxu0 %v508
    %708 = vmatpush1.bf16.msra.mxu0 %v507
    %709 = vmatprep.subr.bf16.mxu0 %v510
    %710 = vmatpush1.bf16.msra.mxu0 %v509
    %711 = vmatprep.subr.bf16.mxu0 %v512
    %712 = vmatpush1.bf16.msra.mxu0 %v511
    %713 = vmatprep.subr.bf16.mxu0 %v514
    %714 = vmatpush1.bf16.msra.mxu0 %v513
    %715 = vmatprep.subr.bf16.mxu0 %v516
    %716 = vmatpush1.bf16.msra.mxu0 %v515
    %717 = vmatprep.subr.bf16.mxu0 %v518
    %718 = vmatpush1.bf16.msra.mxu0 %v517
    %719 = vmatprep.subr.bf16.mxu0 %v520
    %720 = vmatpush1.bf16.msra.mxu0 %v519
    %721 = vmatprep.subr.bf16.mxu0 %v522
    %722 = vmatpush1.bf16.msra.mxu0 %v521
    %723 = vmatprep.subr.bf16.mxu0 %v524
    %724 = vmatpush1.bf16.msra.mxu0 %v523
    %725 = vmatprep.mubr.bf16.mxu0 %v187
    %726 = vmatmul.mubr.bf16.gmra.mrb[0].mxu0 %v186
    %v727 = vpop.f32.mrb[0].mxu0
    %v728 = vadd.f32 %v157, %v727
    %v729 = vpop.f32.mrb[0].mxu0
    %v730 = vadd.f32 %v161, %v729
    %v731 = vpop.f32.mrb[0].mxu0
    %v732 = vadd.f32 %v157, %v731
    %v733 = vpop.f32.mrb[0].mxu0
    %v734 = vadd.f32 %v161, %v733
    %735 = vdwg.mxu0
    %736 = vmatprep.subr.bf16.mxu0 %v526
    %737 = vmatpush1.bf16.msra.mxu0 %v525
    %738 = vmatprep.subr.bf16.mxu0 %v528
    %739 = vmatpush1.bf16.msra.mxu0 %v527
    %740 = vmatprep.subr.bf16.mxu0 %v530
    %741 = vmatpush1.bf16.msra.mxu0 %v529
    %742 = vmatprep.subr.bf16.mxu0 %v532
    %743 = vmatpush1.bf16.msra.mxu0 %v531
    %744 = vmatprep.subr.bf16.mxu0 %v534
    %745 = vmatpush1.bf16.msra.mxu0 %v533
    %746 = vmatprep.subr.bf16.mxu0 %v536
    %747 = vmatpush1.bf16.msra.mxu0 %v535
    %748 = vmatprep.subr.bf16.mxu0 %v538
    %749 = vmatpush1.bf16.msra.mxu0 %v537
    %750 = vmatprep.subr.bf16.mxu0 %v540
    %751 = vmatpush1.bf16.msra.mxu0 %v539
    %752 = vmatprep.subr.bf16.mxu0 %v542
    %753 = vmatpush1.bf16.msra.mxu0 %v541
    %754 = vmatprep.subr.bf16.mxu0 %v544
    %755 = vmatpush1.bf16.msra.mxu0 %v543
    %756 = vmatprep.subr.bf16.mxu0 %v546
    %757 = vmatpush1.bf16.msra.mxu0 %v545
    %758 = vmatprep.subr.bf16.mxu0 %v548
    %759 = vmatpush1.bf16.msra.mxu0 %v547
    %760 = vmatprep.subr.bf16.mxu0 %v550
    %761 = vmatpush1.bf16.msra.mxu0 %v549
    %762 = vmatprep.subr.bf16.mxu0 %v552
    %763 = vmatpush1.bf16.msra.mxu0 %v551
    %764 = vmatprep.subr.bf16.mxu0 %v554
    %765 = vmatpush1.bf16.msra.mxu0 %v553
    %766 = vmatprep.subr.bf16.mxu0 %v556
    %767 = vmatpush1.bf16.msra.mxu0 %v555
    %768 = vmatprep.mubr.bf16.mxu0 %v189
    %769 = vmatmul.mubr.bf16.gmra.mrb[0].mxu0 %v188
    %v770 = vpop.f32.mrb[0].mxu0
    %v771 = vadd.f32 %v728, %v770
    %v772 = vpop.f32.mrb[0].mxu0
    %v773 = vadd.f32 %v730, %v772
    %v774 = vpop.f32.mrb[0].mxu0
    %v775 = vadd.f32 %v732, %v774
    %v776 = vpop.f32.mrb[0].mxu0
    %v777 = vadd.f32 %v734, %v776
    %778 = vdwg.mxu0
    %779 = vmatprep.subr.bf16.mxu0 %v558
    %780 = vmatpush1.bf16.msra.mxu0 %v557
    %781 = vmatprep.subr.bf16.mxu0 %v560
    %782 = vmatpush1.bf16.msra.mxu0 %v559
    %783 = vmatprep.subr.bf16.mxu0 %v562
    %784 = vmatpush1.bf16.msra.mxu0 %v561
    %785 = vmatprep.subr.bf16.mxu0 %v564
    %786 = vmatpush1.bf16.msra.mxu0 %v563
    %787 = vmatprep.subr.bf16.mxu0 %v566
    %788 = vmatpush1.bf16.msra.mxu0 %v565
    %789 = vmatprep.subr.bf16.mxu0 %v568
    %790 = vmatpush1.bf16.msra.mxu0 %v567
    %791 = vmatprep.subr.bf16.mxu0 %v570
    %792 = vmatpush1.bf16.msra.mxu0 %v569
    %793 = vmatprep.subr.bf16.mxu0 %v572
    %794 = vmatpush1.bf16.msra.mxu0 %v571
    %795 = vmatprep.subr.bf16.mxu0 %v574
    %796 = vmatpush1.bf16.msra.mxu0 %v573
    %797 = vmatprep.subr.bf16.mxu0 %v576
    %798 = vmatpush1.bf16.msra.mxu0 %v575
    %799 = vmatprep.subr.bf16.mxu0 %v578
    %800 = vmatpush1.bf16.msra.mxu0 %v577
    %801 = vmatprep.subr.bf16.mxu0 %v580
    %802 = vmatpush1.bf16.msra.mxu0 %v579
    %803 = vmatprep.subr.bf16.mxu0 %v582
    %804 = vmatpush1.bf16.msra.mxu0 %v581
    %805 = vmatprep.subr.bf16.mxu0 %v584
    %806 = vmatpush1.bf16.msra.mxu0 %v583
    %807 = vmatprep.subr.bf16.mxu0 %v586
    %808 = vmatpush1.bf16.msra.mxu0 %v585
    %809 = vmatprep.subr.bf16.mxu0 %v588
    %810 = vmatpush1.bf16.msra.mxu0 %v587
    %811 = vmatprep.mubr.bf16.mxu0 %v191
    %812 = vmatmul.mubr.bf16.gmra.mrb[0].mxu0 %v190
    %v813 = vpop.f32.mrb[0].mxu0
    %v814 = vadd.f32 %v771, %v813
    %v815 = vpop.f32.mrb[0].mxu0
    %v816 = vadd.f32 %v773, %v815
    %v817 = vpop.f32.mrb[0].mxu0
    %v818 = vadd.f32 %v775, %v817
    %v819 = vpop.f32.mrb[0].mxu0
    %v820 = vadd.f32 %v777, %v819
    %821 = vdwg.mxu0
    %822 = vmatprep.subr.bf16.mxu0 %v590
    %823 = vmatpush1.bf16.msra.mxu0 %v589
    %824 = vmatprep.subr.bf16.mxu0 0
    %825 = vmatpush1.bf16.msra.mxu0 0
    %826 = vmatprep.subr.bf16.mxu0 0
    %827 = vmatpush1.bf16.msra.mxu0 0
    %828 = vmatprep.subr.bf16.mxu0 0
    %829 = vmatpush1.bf16.msra.mxu0 0
    %830 = vmatprep.subr.bf16.mxu0 0
    %831 = vmatpush1.bf16.msra.mxu0 0
    %832 = vmatprep.subr.bf16.mxu0 0
    %833 = vmatpush1.bf16.msra.mxu0 0
    %834 = vmatprep.subr.bf16.mxu0 0
    %835 = vmatpush1.bf16.msra.mxu0 0
    %836 = vmatprep.subr.bf16.mxu0 0
    %837 = vmatpush1.bf16.msra.mxu0 0
    %838 = vmatprep.subr.bf16.mxu0 0
    %839 = vmatpush1.bf16.msra.mxu0 0
    %840 = vmatprep.subr.bf16.mxu0 0
    %841 = vmatpush1.bf16.msra.mxu0 0
    %842 = vmatprep.subr.bf16.mxu0 0
    %843 = vmatpush1.bf16.msra.mxu0 0
    %844 = vmatprep.subr.bf16.mxu0 0
    %845 = vmatpush1.bf16.msra.mxu0 0
    %846 = vmatprep.subr.bf16.mxu0 0
    %847 = vmatpush1.bf16.msra.mxu0 0
    %848 = vmatprep.subr.bf16.mxu0 0
    %849 = vmatpush1.bf16.msra.mxu0 0
    %850 = vmatprep.subr.bf16.mxu0 0
    %851 = vmatpush1.bf16.msra.mxu0 0
    %852 = vmatprep.subr.bf16.mxu0 0
    %853 = vmatpush1.bf16.msra.mxu0 0
    %854 = vmatprep.mubr.bf16.mxu0 0
    %855 = vmatmul.mubr.bf16.gmra.mrb[0].mxu0 %v691
    %v856 = vpop.f32.mrb[0].mxu0
    %v857 = vadd.f32 %v814, %v856
    %v858 = vpop.f32.mrb[0].mxu0
    %v859 = vadd.f32 %v816, %v858
    %v860 = vpop.f32.mrb[0].mxu0
    %v861 = vadd.f32 %v818, %v860
    %v862 = vpop.f32.mrb[0].mxu0
    %v863 = vadd.f32 %v820, %v862
    %864 = vdwg.mxu0
    %v865 = vmax.f32 %v857, 0.0
    %v866 = vmax.f32 %v859, 0.0
    %v867 = vmax.f32 %v861, 0.0
    %v868 = vmax.f32 %v863, 0.0
    %v869 = vpack.c.bf16 %v867, %v865
    %v870 = vpack.c.bf16 %v868, %v866
    %v871 = vld [vmem:[%s3] sm:$0xf]
    %v872 = vld [vmem:[%s3 + $0x4] sm:$0xf]
    %v873 = vld [vmem:[%s3 + $0x8] sm:$0xf]
    %v874 = vld [vmem:[%s3 + $0xc] sm:$0xf]
    %v875 = vld [vmem:[%s3 + $0x10] sm:$0xf]
    %v876 = vld [vmem:[%s3 + $0x14] sm:$0xf]
    %v877 = vld [vmem:[%s3 + $0x18] sm:$0xf]
    %v878 = vld [vmem:[%s3 + $0x1c] sm:$0xf]
    %v879 = vld [vmem:[%s3 + $0x20] sm:$0xf]
    %v880 = vld [vmem:[%s3 + $0x24] sm:$0xf]
    %v881 = vld [vmem:[%s3 + $0x28] sm:$0xf]
    %v882 = vld [vmem:[%s3 + $0x2c] sm:$0xf]
    %v883 = vld [vmem:[%s3 + $0x30] sm:$0xf]
    %v884 = vld [vmem:[%s3 + $0x34] sm:$0xf]
    %v885 = vld [vmem:[%s3 + $0x38] sm:$0xf]
    %v886 = vld [vmem:[%s3 + $0x3c] sm:$0xf]
    %v887 = vld [vmem:[%s3 + $0x40] sm:$0xf]
    %v888 = vld [vmem:[%s3 + $0x44] sm:$0xf]
    %v889 = vld [vmem:[%s3 + $0x48] sm:$0xf]
    %v890 = vld [vmem:[%s3 + $0x4c] sm:$0xf]
    %v891 = vld [vmem:[%s3 + $0x50] sm:$0xf]
    %v892 = vld [vmem:[%s3 + $0x54] sm:$0xf]
    %v893 = vld [vmem:[%s3 + $0x58] sm:$0xf]
    %v894 = vld [vmem:[%s3 + $0x5c] sm:$0xf]
    %v895 = vld [vmem:[%s3 + $0x60] sm:$0xf]
    %v896 = vld [vmem:[%s3 + $0x64] sm:$0xf]
    %v897 = vld [vmem:[%s3 + $0x68] sm:$0xf]
    %v898 = vld [vmem:[%s3 + $0x6c] sm:$0xf]
    %v899 = vld [vmem:[%s3 + $0x70] sm:$0xf]
    %v900 = vld [vmem:[%s3 + $0x74] sm:$0xf]
    %v901 = vld [vmem:[%s3 + $0x78] sm:$0xf]
    %v902 = vld [vmem:[%s3 + $0x7c] sm:$0xf]
    %v903 = vld [vmem:[%s4] sm:$0x1]
    %v905 = vlaneseq
    %v906 = vshrl.u32 %v905, 7
    %v907 = vsub.s32 0, %v906
    %v908 = vrot.slane %v903, %v907
    %v942 = vunpack.c.l.b16 %v871
    %v943 = vunpack.c.l.b16 %v872
    %v944 = vunpack.c.l.b16 %v873
    %v945 = vunpack.c.l.b16 %v874
    %v946 = vunpack.c.l.b16 %v875
    %v947 = vunpack.c.l.b16 %v876
    %v948 = vunpack.c.l.b16 %v877
    %v949 = vunpack.c.l.b16 %v878
    %v950 = vunpack.c.l.b16 %v879
    %v951 = vunpack.c.l.b16 %v880
    %v952 = vunpack.c.l.b16 %v881
    %v953 = vunpack.c.l.b16 %v882
    %v954 = vunpack.c.l.b16 %v883
    %v955 = vunpack.c.l.b16 %v884
    %v956 = vunpack.c.l.b16 %v885
    %v957 = vunpack.c.l.b16 %v886
    %v958 = vunpack.c.l.b16 %v887
    %v959 = vunpack.c.l.b16 %v888
    %v960 = vunpack.c.l.b16 %v889
    %v961 = vunpack.c.l.b16 %v890
    %v962 = vunpack.c.l.b16 %v891
    %v963 = vunpack.c.l.b16 %v892
    %v964 = vunpack.c.l.b16 %v893
    %v965 = vunpack.c.l.b16 %v894
    %v966 = vunpack.c.l.b16 %v895
    %v967 = vunpack.c.l.b16 %v896
    %v968 = vunpack.c.l.b16 %v897
    %v969 = vunpack.c.l.b16 %v898
    %v970 = vunpack.c.l.b16 %v899
    %v971 = vunpack.c.l.b16 %v900
    %v972 = vunpack.c.l.b16 %v901
    %v973 = vunpack.c.l.b16 %v902
    %v974 = vpack.c.b16 %v943, %v942
    %v975 = vpack.c.b16 %v945, %v944
    %v976 = vpack.c.b16 %v947, %v946
    %v977 = vpack.c.b16 %v949, %v948
    %v978 = vpack.c.b16 %v951, %v950
    %v979 = vpack.c.b16 %v953, %v952
    %v980 = vpack.c.b16 %v955, %v954
    %v981 = vpack.c.b16 %v957, %v956
    %v982 = vpack.c.b16 %v959, %v958
    %v983 = vpack.c.b16 %v961, %v960
    %v984 = vpack.c.b16 %v963, %v962
    %v985 = vpack.c.b16 %v965, %v964
    %v986 = vpack.c.b16 %v967, %v966
    %v987 = vpack.c.b16 %v969, %v968
    %v988 = vpack.c.b16 %v971, %v970
    %v989 = vpack.c.b16 %v973, %v972
    %1006 = vmatprep.subr.bf16.mxu0 0
    %1007 = vmatpush1.bf16.msra.mxu0 %v974
    %1008 = vmatprep.subr.bf16.mxu0 0
    %1009 = vmatpush1.bf16.msra.mxu0 %v975
    %1010 = vmatprep.subr.bf16.mxu0 0
    %1011 = vmatpush1.bf16.msra.mxu0 %v976
    %1012 = vmatprep.subr.bf16.mxu0 0
    %1013 = vmatpush1.bf16.msra.mxu0 %v977
    %1014 = vmatprep.subr.bf16.mxu0 0
    %1015 = vmatpush1.bf16.msra.mxu0 %v978
    %1016 = vmatprep.subr.bf16.mxu0 0
    %1017 = vmatpush1.bf16.msra.mxu0 %v979
    %1018 = vmatprep.subr.bf16.mxu0 0
    %1019 = vmatpush1.bf16.msra.mxu0 %v980
    %1020 = vmatprep.subr.bf16.mxu0 0
    %1021 = vmatpush1.bf16.msra.mxu0 %v981
    %1022 = vmatprep.subr.bf16.mxu0 0
    %1023 = vmatpush1.bf16.msra.mxu0 %v982
    %1024 = vmatprep.subr.bf16.mxu0 0
    %1025 = vmatpush1.bf16.msra.mxu0 %v983
    %1026 = vmatprep.subr.bf16.mxu0 0
    %1027 = vmatpush1.bf16.msra.mxu0 %v984
    %1028 = vmatprep.subr.bf16.mxu0 0
    %1029 = vmatpush1.bf16.msra.mxu0 %v985
    %1030 = vmatprep.subr.bf16.mxu0 0
    %1031 = vmatpush1.bf16.msra.mxu0 %v986
    %1032 = vmatprep.subr.bf16.mxu0 0
    %1033 = vmatpush1.bf16.msra.mxu0 %v987
    %1034 = vmatprep.subr.bf16.mxu0 0
    %1035 = vmatpush1.bf16.msra.mxu0 %v988
    %1036 = vmatprep.subr.bf16.mxu0 0
    %1037 = vmatpush1.bf16.msra.mxu0 %v989
    %1038 = vmatprep.mubr.bf16.mxu0 %v870
    %1039 = vmatmul.mubr.bf16.gmra.mrb[0].mxu0 %v869
    %v1040 = vpop.f32.mrb[0].mxu0
    %v1041 = vadd.f32 %v908, %v1040
    %v1042 = vpop.f32.mrb[0].mxu0
    %v1043 = vpop.f32.mrb[0].mxu0
    %v1044 = vadd.f32 %v908, %v1043
    %v1045 = vpop.f32.mrb[0].mxu0
    %1046 = vdwg.mxu0
    %v1047 = vmax.f32 %v1041, 0.0
    %v1048 = vmax.f32 %v1044, 0.0
    %v1049 = vpack.c.bf16 %v1048, %v1047
    %v1050 = vld [vmem:[%s5] sm:$0xf]
    %v1051 = vld [vmem:[%s5 + $0x4] sm:$0xf]
    %v1052 = vld [vmem:[%s5 + $0x8] sm:$0xf]
    %v1053 = vld [vmem:[%s5 + $0xc] sm:$0xf]
    %v1054 = vld [vmem:[%s5 + $0x10] sm:$0xf]
    %v1055 = vld [vmem:[%s5 + $0x14] sm:$0xf]
    %v1056 = vld [vmem:[%s5 + $0x18] sm:$0xf]
    %v1057 = vld [vmem:[%s5 + $0x1c] sm:$0xf]
    %v1058 = vld [vmem:[%s5 + $0x20] sm:$0xf]
    %v1059 = vld [vmem:[%s5 + $0x24] sm:$0xf]
    %v1060 = vld [vmem:[%s5 + $0x28] sm:$0xf]
    %v1061 = vld [vmem:[%s5 + $0x2c] sm:$0xf]
    %v1062 = vld [vmem:[%s5 + $0x30] sm:$0xf]
    %v1063 = vld [vmem:[%s5 + $0x34] sm:$0xf]
    %v1064 = vld [vmem:[%s5 + $0x38] sm:$0xf]
    %v1065 = vld [vmem:[%s5 + $0x3c] sm:$0xf]
    %v1066 = vld [vmem:[%s6] sm:$0x1]
    %v1068 = vlaneseq
    %v1069 = vshrl.u32 %v1068, 7
    %v1070 = vsub.s32 0, %v1069
    %v1071 = vrot.slane %v1066, %v1070
    %v1089 = vunpack.c.l.b16 %v1050
    %v1090 = vunpack.c.l.b16 %v1051
    %v1091 = vunpack.c.l.b16 %v1052
    %v1092 = vunpack.c.l.b16 %v1053
    %v1093 = vunpack.c.l.b16 %v1054
    %v1094 = vunpack.c.l.b16 %v1055
    %v1095 = vunpack.c.l.b16 %v1056
    %v1096 = vunpack.c.l.b16 %v1057
    %v1097 = vunpack.c.l.b16 %v1058
    %v1098 = vunpack.c.l.b16 %v1059
    %v1099 = vunpack.c.l.b16 %v1060
    %v1100 = vunpack.c.l.b16 %v1061
    %v1101 = vunpack.c.l.b16 %v1062
    %v1102 = vunpack.c.l.b16 %v1063
    %v1103 = vunpack.c.l.b16 %v1064
    %v1104 = vunpack.c.l.b16 %v1065
    %v1105 = vpack.c.b16 %v1090, %v1089
    %v1106 = vpack.c.b16 %v1092, %v1091
    %v1107 = vpack.c.b16 %v1094, %v1093
    %v1108 = vpack.c.b16 %v1096, %v1095
    %v1109 = vpack.c.b16 %v1098, %v1097
    %v1110 = vpack.c.b16 %v1100, %v1099
    %v1111 = vpack.c.b16 %v1102, %v1101
    %v1112 = vpack.c.b16 %v1104, %v1103
    %1121 = vmatprep.subr.bf16.mxu0 0
    %1122 = vmatpush1.bf16.msra.mxu0 %v1105
    %1123 = vmatprep.subr.bf16.mxu0 0
    %1124 = vmatpush1.bf16.msra.mxu0 %v1106
    %1125 = vmatprep.subr.bf16.mxu0 0
    %1126 = vmatpush1.bf16.msra.mxu0 %v1107
    %1127 = vmatprep.subr.bf16.mxu0 0
    %1128 = vmatpush1.bf16.msra.mxu0 %v1108
    %1129 = vmatprep.subr.bf16.mxu0 0
    %1130 = vmatpush1.bf16.msra.mxu0 %v1109
    %1131 = vmatprep.subr.bf16.mxu0 0
    %1132 = vmatpush1.bf16.msra.mxu0 %v1110
    %1133 = vmatprep.subr.bf16.mxu0 0
    %1134 = vmatpush1.bf16.msra.mxu0 %v1111
    %1135 = vmatprep.subr.bf16.mxu0 0
    %1136 = vmatpush1.bf16.msra.mxu0 %v1112
    %1137 = vmatprep.subr.bf16.mxu0 0
    %1138 = vmatpush1.bf16.msra.mxu0 0
    %1139 = vmatprep.subr.bf16.mxu0 0
    %1140 = vmatpush1.bf16.msra.mxu0 0
    %1141 = vmatprep.subr.bf16.mxu0 0
    %1142 = vmatpush1.bf16.msra.mxu0 0
    %1143 = vmatprep.subr.bf16.mxu0 0
    %1144 = vmatpush1.bf16.msra.mxu0 0
    %1145 = vmatprep.subr.bf16.mxu0 0
    %1146 = vmatpush1.bf16.msra.mxu0 0
    %1147 = vmatprep.subr.bf16.mxu0 0
    %1148 = vmatpush1.bf16.msra.mxu0 0
    %1149 = vmatprep.subr.bf16.mxu0 0
    %1150 = vmatpush1.bf16.msra.mxu0 0
    %1151 = vmatprep.subr.bf16.mxu0 0
    %1152 = vmatpush1.bf16.msra.mxu0 0
    %1153 = vmatprep.mubr.bf16.mxu0 0
    %1154 = vmatmul.mubr.bf16.gmra.mrb[0].mxu0 %v1049
    %v1155 = vpop.f32.mrb[0].mxu0
    %v1156 = vadd.f32 %v1071, %v1155
    %v1157 = vpop.f32.mrb[0].mxu0
    %v1158 = vpop.f32.mrb[0].mxu0
    %v1159 = vadd.f32 %v1071, %v1158
    %v1160 = vpop.f32.mrb[0].mxu0
    %1161 = vdwg.mxu0
    %v1162 = vmax.f32 %v1156, 0.0
    %v1163 = vmax.f32 %v1159, 0.0
    %v1164 = vpack.c.bf16 %v1163, %v1162
    %v1165 = vld [vmem:[%s7] sm:$0xf]
    %v1166 = vld [vmem:[%s7 + $0x4] sm:$0xf]
    %v1167 = vld [vmem:[%s7 + $0x8] sm:$0xf]
    %v1168 = vld [vmem:[%s7 + $0xc] sm:$0xf]
    %v1169 = vld [vmem:[%s7 + $0x10] sm:$0xf]
    %v1170 = vld [vmem:[%s7 + $0x14] sm:$0xf]
    %v1171 = vld [vmem:[%s7 + $0x18] sm:$0xf]
    %v1172 = vld [vmem:[%s7 + $0x1c] sm:$0xf]
    %v1173 = vld [vmem:[%s7 + $0x20] sm:$0xf]
    %v1174 = vld [vmem:[%s7 + $0x24] sm:$0xf]
    %v1175 = vld [vmem:[%s7 + $0x28] sm:$0xf]
    %v1176 = vld [vmem:[%s7 + $0x2c] sm:$0xf]
    %v1177 = vld [vmem:[%s7 + $0x30] sm:$0xf]
    %v1178 = vld [vmem:[%s7 + $0x34] sm:$0xf]
    %v1179 = vld [vmem:[%s7 + $0x38] sm:$0xf]
    %v1180 = vld [vmem:[%s7 + $0x3c] sm:$0xf]
    %v1181 = vld [vmem:[%s8] sm:$0x1]
    %v1183 = vlaneseq
    %v1184 = vshrl.u32 %v1183, 7
    %v1185 = vsub.s32 0, %v1184
    %v1186 = vrot.slane %v1181, %v1185
    %v1204 = vunpack.c.l.b16 %v1165
    %v1205 = vunpack.c.l.b16 %v1166
    %v1206 = vunpack.c.l.b16 %v1167
    %v1207 = vunpack.c.l.b16 %v1168
    %v1208 = vunpack.c.l.b16 %v1169
    %v1209 = vunpack.c.l.b16 %v1170
    %v1210 = vunpack.c.l.b16 %v1171
    %v1211 = vunpack.c.l.b16 %v1172
    %v1212 = vunpack.c.l.b16 %v1173
    %v1213 = vunpack.c.l.b16 %v1174
    %v1214 = vunpack.c.l.b16 %v1175
    %v1215 = vunpack.c.l.b16 %v1176
    %v1216 = vunpack.c.l.b16 %v1177
    %v1217 = vunpack.c.l.b16 %v1178
    %v1218 = vunpack.c.l.b16 %v1179
    %v1219 = vunpack.c.l.b16 %v1180
    %v1220 = vpack.c.b16 %v1205, %v1204
    %v1221 = vpack.c.b16 %v1207, %v1206
    %v1222 = vpack.c.b16 %v1209, %v1208
    %v1223 = vpack.c.b16 %v1211, %v1210
    %v1224 = vpack.c.b16 %v1213, %v1212
    %v1225 = vpack.c.b16 %v1215, %v1214
    %v1226 = vpack.c.b16 %v1217, %v1216
    %v1227 = vpack.c.b16 %v1219, %v1218
    %1236 = vmatprep.subr.bf16.mxu0 0
    %1237 = vmatpush1.bf16.msra.mxu0 %v1220
    %1238 = vmatprep.subr.bf16.mxu0 0
    %1239 = vmatpush1.bf16.msra.mxu0 %v1221
    %1240 = vmatprep.subr.bf16.mxu0 0
    %1241 = vmatpush1.bf16.msra.mxu0 %v1222
    %1242 = vmatprep.subr.bf16.mxu0 0
    %1243 = vmatpush1.bf16.msra.mxu0 %v1223
    %1244 = vmatprep.subr.bf16.mxu0 0
    %1245 = vmatpush1.bf16.msra.mxu0 %v1224
    %1246 = vmatprep.subr.bf16.mxu0 0
    %1247 = vmatpush1.bf16.msra.mxu0 %v1225
    %1248 = vmatprep.subr.bf16.mxu0 0
    %1249 = vmatpush1.bf16.msra.mxu0 %v1226
    %1250 = vmatprep.subr.bf16.mxu0 0
    %1251 = vmatpush1.bf16.msra.mxu0 %v1227
    %1252 = vmatprep.subr.bf16.mxu0 0
    %1253 = vmatpush1.bf16.msra.mxu0 0
    %1254 = vmatprep.subr.bf16.mxu0 0
    %1255 = vmatpush1.bf16.msra.mxu0 0
    %1256 = vmatprep.subr.bf16.mxu0 0
    %1257 = vmatpush1.bf16.msra.mxu0 0
    %1258 = vmatprep.subr.bf16.mxu0 0
    %1259 = vmatpush1.bf16.msra.mxu0 0
    %1260 = vmatprep.subr.bf16.mxu0 0
    %1261 = vmatpush1.bf16.msra.mxu0 0
    %1262 = vmatprep.subr.bf16.mxu0 0
    %1263 = vmatpush1.bf16.msra.mxu0 0
    %1264 = vmatprep.subr.bf16.mxu0 0
    %1265 = vmatpush1.bf16.msra.mxu0 0
    %1266 = vmatprep.subr.bf16.mxu0 0
    %1267 = vmatpush1.bf16.msra.mxu0 0
    %1268 = vmatprep.mubr.bf16.mxu0 0
    %1269 = vmatmul.mubr.bf16.gmra.mrb[0].mxu0 %v1164
    %v1270 = vpop.f32.mrb[0].mxu0
    %v1271 = vadd.f32 %v1186, %v1270
    %v1272 = vpop.f32.mrb[0].mxu0
    %v1273 = vpop.f32.mrb[0].mxu0
    %v1274 = vadd.f32 %v1186, %v1273
    %v1275 = vpop.f32.mrb[0].mxu0
    %1276 = vdwg.mxu0
    %v1277 = vmax.f32 %v1271, 0.0
    %v1278 = vmax.f32 %v1274, 0.0
    %v1279 = vpack.c.bf16 %v1278, %v1277
    %v1280 = vld [vmem:[%s9] sm:$0xff]
    %v1281 = vld [vmem:[%s9 + $0x8] sm:$0xff]
    %v1282 = vld [vmem:[%s9 + $0x10] sm:$0xff]
    %v1283 = vld [vmem:[%s9 + $0x18] sm:$0xff]
    %v1284 = vld [vmem:[%s9 + $0x20] sm:$0xff]
    %v1285 = vld [vmem:[%s9 + $0x28] sm:$0xff]
    %v1286 = vld [vmem:[%s9 + $0x30] sm:$0xff]
    %v1287 = vld [vmem:[%s9 + $0x38] sm:$0xff]
    %v1288 = vld [vmem:[%s9 + $0x40] sm:$0xff]
    %v1289 = vld [vmem:[%s9 + $0x48] sm:$0xff]
    %v1290 = vld [vmem:[%s9 + $0x50] sm:$0xff]
    %v1291 = vld [vmem:[%s9 + $0x58] sm:$0xff]
    %v1292 = vld [vmem:[%s9 + $0x60] sm:$0xff]
    %v1293 = vld [vmem:[%s9 + $0x68] sm:$0xff]
    %v1294 = vld [vmem:[%s9 + $0x70] sm:$0xff]
    %v1295 = vld [vmem:[%s9 + $0x78] sm:$0xff]
    %v1296 = vld [vmem:[%s10] sm:$0x3]
    %v1298 = vlaneseq
    %v1299 = vshrl.u32 %v1298, 7
    %v1300 = vsub.s32 0, %v1299
    %v1301 = vrot.slane %v1296, %v1300
    %v1302 = vlaneseq
    %v1303 = vshrl.u32 %v1302, 7
    %v1304 = vsub.s32 1, %v1303
    %v1305 = vrot.slane %v1296, %v1304
    %v1324 = vunpack.c.l.b16 %v1280
    %v1325 = vunpack.c.h.b16 %v1280
    %v1326 = vunpack.c.l.b16 %v1281
    %v1327 = vunpack.c.h.b16 %v1281
    %v1328 = vunpack.c.l.b16 %v1282
    %v1329 = vunpack.c.h.b16 %v1282
    %v1330 = vunpack.c.l.b16 %v1283
    %v1331 = vunpack.c.h.b16 %v1283
    %v1332 = vunpack.c.l.b16 %v1284
    %v1333 = vunpack.c.h.b16 %v1284
    %v1334 = vunpack.c.l.b16 %v1285
    %v1335 = vunpack.c.h.b16 %v1285
    %v1336 = vunpack.c.l.b16 %v1286
    %v1337 = vunpack.c.h.b16 %v1286
    %v1338 = vunpack.c.l.b16 %v1287
    %v1339 = vunpack.c.h.b16 %v1287
    %v1340 = vunpack.c.l.b16 %v1288
    %v1341 = vunpack.c.h.b16 %v1288
    %v1342 = vunpack.c.l.b16 %v1289
    %v1343 = vunpack.c.h.b16 %v1289
    %v1344 = vunpack.c.l.b16 %v1290
    %v1345 = vunpack.c.h.b16 %v1290
    %v1346 = vunpack.c.l.b16 %v1291
    %v1347 = vunpack.c.h.b16 %v1291
    %v1348 = vunpack.c.l.b16 %v1292
    %v1349 = vunpack.c.h.b16 %v1292
    %v1350 = vunpack.c.l.b16 %v1293
    %v1351 = vunpack.c.h.b16 %v1293
    %v1352 = vunpack.c.l.b16 %v1294
    %v1353 = vunpack.c.h.b16 %v1294
    %v1354 = vunpack.c.l.b16 %v1295
    %v1355 = vunpack.c.h.b16 %v1295
    %v1356 = vpack.c.b16 %v1326, %v1324
    %v1357 = vpack.c.b16 %v1327, %v1325
    %v1358 = vpack.c.b16 %v1330, %v1328
    %v1359 = vpack.c.b16 %v1331, %v1329
    %v1360 = vpack.c.b16 %v1334, %v1332
    %v1361 = vpack.c.b16 %v1335, %v1333
    %v1362 = vpack.c.b16 %v1338, %v1336
    %v1363 = vpack.c.b16 %v1339, %v1337
    %v1364 = vpack.c.b16 %v1342, %v1340
    %v1365 = vpack.c.b16 %v1343, %v1341
    %v1366 = vpack.c.b16 %v1346, %v1344
    %v1367 = vpack.c.b16 %v1347, %v1345
    %v1368 = vpack.c.b16 %v1350, %v1348
    %v1369 = vpack.c.b16 %v1351, %v1349
    %v1370 = vpack.c.b16 %v1354, %v1352
    %v1371 = vpack.c.b16 %v1355, %v1353
    %1388 = vmatprep.subr.bf16.mxu0 %v1357
    %1389 = vmatpush1.bf16.msra.mxu0 %v1356
    %1390 = vmatprep.subr.bf16.mxu0 %v1359
    %1391 = vmatpush1.bf16.msra.mxu0 %v1358
    %1392 = vmatprep.subr.bf16.mxu0 %v1361
    %1393 = vmatpush1.bf16.msra.mxu0 %v1360
    %1394 = vmatprep.subr.bf16.mxu0 %v1363
    %1395 = vmatpush1.bf16.msra.mxu0 %v1362
    %1396 = vmatprep.subr.bf16.mxu0 %v1365
    %1397 = vmatpush1.bf16.msra.mxu0 %v1364
    %1398 = vmatprep.subr.bf16.mxu0 %v1367
    %1399 = vmatpush1.bf16.msra.mxu0 %v1366
    %1400 = vmatprep.subr.bf16.mxu0 %v1369
    %1401 = vmatpush1.bf16.msra.mxu0 %v1368
    %1402 = vmatprep.subr.bf16.mxu0 %v1371
    %1403 = vmatpush1.bf16.msra.mxu0 %v1370
    %1404 = vmatprep.subr.bf16.mxu0 0
    %1405 = vmatpush1.bf16.msra.mxu0 0
    %1406 = vmatprep.subr.bf16.mxu0 0
    %1407 = vmatpush1.bf16.msra.mxu0 0
    %1408 = vmatprep.subr.bf16.mxu0 0
    %1409 = vmatpush1.bf16.msra.mxu0 0
    %1410 = vmatprep.subr.bf16.mxu0 0
    %1411 = vmatpush1.bf16.msra.mxu0 0
    %1412 = vmatprep.subr.bf16.mxu0 0
    %1413 = vmatpush1.bf16.msra.mxu0 0
    %1414 = vmatprep.subr.bf16.mxu0 0
    %1415 = vmatpush1.bf16.msra.mxu0 0
    %1416 = vmatprep.subr.bf16.mxu0 0
    %1417 = vmatpush1.bf16.msra.mxu0 0
    %1418 = vmatprep.subr.bf16.mxu0 0
    %1419 = vmatpush1.bf16.msra.mxu0 0
    %1420 = vmatprep.mubr.bf16.mxu0 0
    %1421 = vmatmul.mubr.bf16.gmra.mrb[0].mxu0 %v1279
    %v1422 = vpop.f32.mrb[0].mxu0
    %v1423 = vadd.f32 %v1301, %v1422
    %v1424 = vpop.f32.mrb[0].mxu0
    %v1425 = vadd.f32 %v1305, %v1424
    %v1426 = vpop.f32.mrb[0].mxu0
    %v1427 = vadd.f32 %v1301, %v1426
    %v1428 = vpop.f32.mrb[0].mxu0
    %v1429 = vadd.f32 %v1305, %v1428
    %1430 = vdwg.mxu0
    %v1431 = vmax.f32 %v1423, 0.0
    %v1432 = vmax.f32 %v1425, 0.0
    %v1433 = vmax.f32 %v1427, 0.0
    %v1434 = vmax.f32 %v1429, 0.0
    %v1435 = vpack.c.bf16 %v1433, %v1431
    %v1436 = vpack.c.bf16 %v1434, %v1432
    %v1437 = vld [vmem:[%s11] sm:$0xff]
    %v1438 = vld [vmem:[%s11 + $0x8] sm:$0xff]
    %v1439 = vld [vmem:[%s11 + $0x10] sm:$0xff]
    %v1440 = vld [vmem:[%s11 + $0x18] sm:$0xf]
    %v1441 = vld [vmem:[%s11 + $0x1c] sm:$0xff]
    %v1442 = vld [vmem:[%s11 + $0x24] sm:$0xff]
    %v1443 = vld [vmem:[%s11 + $0x2c] sm:$0xff]
    %v1444 = vld [vmem:[%s11 + $0x34] sm:$0xf]
    %v1445 = vld [vmem:[%s11 + $0x38] sm:$0xff]
    %v1446 = vld [vmem:[%s11 + $0x40] sm:$0xff]
    %v1447 = vld [vmem:[%s11 + $0x48] sm:$0xff]
    %v1448 = vld [vmem:[%s11 + $0x50] sm:$0xf]
    %v1449 = vld [vmem:[%s11 + $0x54] sm:$0xff]
    %v1450 = vld [vmem:[%s11 + $0x5c] sm:$0xff]
    %v1451 = vld [vmem:[%s11 + $0x64] sm:$0xff]
    %v1452 = vld [vmem:[%s11 + $0x6c] sm:$0xf]
    %v1453 = vld [vmem:[%s11 + $0x70] sm:$0xff]
    %v1454 = vld [vmem:[%s11 + $0x78] sm:$0xff]
    %v1455 = vld [vmem:[%s11 + $0x80] sm:$0xff]
    %v1456 = vld [vmem:[%s11 + $0x88] sm:$0xf]
    %v1457 = vld [vmem:[%s11 + $0x8c] sm:$0xff]
    %v1458 = vld [vmem:[%s11 + $0x94] sm:$0xff]
    %v1459 = vld [vmem:[%s11 + $0x9c] sm:$0xff]
    %v1460 = vld [vmem:[%s11 + $0xa4] sm:$0xf]
    %v1461 = vld [vmem:[%s11 + $0xa8] sm:$0xff]
    %v1462 = vld [vmem:[%s11 + $0xb0] sm:$0xff]
    %v1463 = vld [vmem:[%s11 + $0xb8] sm:$0xff]
    %v1464 = vld [vmem:[%s11 + $0xc0] sm:$0xf]
    %v1465 = vld [vmem:[%s11 + $0xc4] sm:$0xff]
    %v1466 = vld [vmem:[%s11 + $0xcc] sm:$0xff]
    %v1467 = vld [vmem:[%s11 + $0xd4] sm:$0xff]
    %v1468 = vld [vmem:[%s11 + $0xdc] sm:$0xf]
    %v1469 = vld [vmem:[%s11 + $0xe0] sm:$0xff]
    %v1470 = vld [vmem:[%s11 + $0xe8] sm:$0xff]
    %v1471 = vld [vmem:[%s11 + $0xf0] sm:$0xff]
    %v1472 = vld [vmem:[%s11 + $0xf8] sm:$0xf]
    %v1473 = vld [vmem:[%s11 + $0xfc] sm:$0xff]
    %v1474 = vld [vmem:[%s11 + $0x104] sm:$0xff]
    %v1475 = vld [vmem:[%s11 + $0x10c] sm:$0xff]
    %v1476 = vld [vmem:[%s11 + $0x114] sm:$0xf]
    %v1477 = vld [vmem:[%s11 + $0x118] sm:$0xff]
    %v1478 = vld [vmem:[%s11 + $0x120] sm:$0xff]
    %v1479 = vld [vmem:[%s11 + $0x128] sm:$0xff]
    %v1480 = vld [vmem:[%s11 + $0x130] sm:$0xf]
    %v1481 = vld [vmem:[%s11 + $0x134] sm:$0xff]
    %v1482 = vld [vmem:[%s11 + $0x13c] sm:$0xff]
    %v1483 = vld [vmem:[%s11 + $0x144] sm:$0xff]
    %v1484 = vld [vmem:[%s11 + $0x14c] sm:$0xf]
    %v1485 = vld [vmem:[%s11 + $0x150] sm:$0xff]
    %v1486 = vld [vmem:[%s11 + $0x158] sm:$0xff]
    %v1487 = vld [vmem:[%s11 + $0x160] sm:$0xff]
    %v1488 = vld [vmem:[%s11 + $0x168] sm:$0xf]
    %v1489 = vld [vmem:[%s11 + $0x16c] sm:$0xff]
    %v1490 = vld [vmem:[%s11 + $0x174] sm:$0xff]
    %v1491 = vld [vmem:[%s11 + $0x17c] sm:$0xff]
    %v1492 = vld [vmem:[%s11 + $0x184] sm:$0xf]
    %v1493 = vld [vmem:[%s11 + $0x188] sm:$0xff]
    %v1494 = vld [vmem:[%s11 + $0x190] sm:$0xff]
    %v1495 = vld [vmem:[%s11 + $0x198] sm:$0xff]
    %v1496 = vld [vmem:[%s11 + $0x1a0] sm:$0xf]
    %v1497 = vld [vmem:[%s11 + $0x1a4] sm:$0xff]
    %v1498 = vld [vmem:[%s11 + $0x1ac] sm:$0xff]
    %v1499 = vld [vmem:[%s11 + $0x1b4] sm:$0xff]
    %v1500 = vld [vmem:[%s11 + $0x1bc] sm:$0xf]
    %v1501 = vld [vmem:[%s11 + $0x1c0] sm:$0xff]
    %v1502 = vld [vmem:[%s11 + $0x1c8] sm:$0xff]
    %v1503 = vld [vmem:[%s11 + $0x1d0] sm:$0xff]
    %v1504 = vld [vmem:[%s11 + $0x1d8] sm:$0xf]
    %v1505 = vld [vmem:[%s11 + $0x1dc] sm:$0xff]
    %v1506 = vld [vmem:[%s11 + $0x1e4] sm:$0xff]
    %v1507 = vld [vmem:[%s11 + $0x1ec] sm:$0xff]
    %v1508 = vld [vmem:[%s11 + $0x1f4] sm:$0xf]
    %v1509 = vld [vmem:[%s11 + $0x1f8] sm:$0xff]
    %v1510 = vld [vmem:[%s11 + $0x200] sm:$0xff]
    %v1511 = vld [vmem:[%s11 + $0x208] sm:$0xff]
    %v1512 = vld [vmem:[%s11 + $0x210] sm:$0xf]
    %v1513 = vld [vmem:[%s11 + $0x214] sm:$0xff]
    %v1514 = vld [vmem:[%s11 + $0x21c] sm:$0xff]
    %v1515 = vld [vmem:[%s11 + $0x224] sm:$0xff]
    %v1516 = vld [vmem:[%s11 + $0x22c] sm:$0xf]
    %v1517 = vld [vmem:[%s11 + $0x230] sm:$0xff]
    %v1518 = vld [vmem:[%s11 + $0x238] sm:$0xff]
    %v1519 = vld [vmem:[%s11 + $0x240] sm:$0xff]
    %v1520 = vld [vmem:[%s11 + $0x248] sm:$0xf]
    %v1521 = vld [vmem:[%s11 + $0x24c] sm:$0xff]
    %v1522 = vld [vmem:[%s11 + $0x254] sm:$0xff]
    %v1523 = vld [vmem:[%s11 + $0x25c] sm:$0xff]
    %v1524 = vld [vmem:[%s11 + $0x264] sm:$0xf]
    %v1525 = vld [vmem:[%s11 + $0x268] sm:$0xff]
    %v1526 = vld [vmem:[%s11 + $0x270] sm:$0xff]
    %v1527 = vld [vmem:[%s11 + $0x278] sm:$0xff]
    %v1528 = vld [vmem:[%s11 + $0x280] sm:$0xf]
    %v1529 = vld [vmem:[%s11 + $0x284] sm:$0xff]
    %v1530 = vld [vmem:[%s11 + $0x28c] sm:$0xff]
    %v1531 = vld [vmem:[%s11 + $0x294] sm:$0xff]
    %v1532 = vld [vmem:[%s11 + $0x29c] sm:$0xf]
    %v1533 = vld [vmem:[%s11 + $0x2a0] sm:$0xff]
    %v1534 = vld [vmem:[%s11 + $0x2a8] sm:$0xff]
    %v1535 = vld [vmem:[%s11 + $0x2b0] sm:$0xff]
    %v1536 = vld [vmem:[%s11 + $0x2b8] sm:$0xf]
    %v1537 = vld [vmem:[%s11 + $0x2bc] sm:$0xff]
    %v1538 = vld [vmem:[%s11 + $0x2c4] sm:$0xff]
    %v1539 = vld [vmem:[%s11 + $0x2cc] sm:$0xff]
    %v1540 = vld [vmem:[%s11 + $0x2d4] sm:$0xf]
    %v1541 = vld [vmem:[%s11 + $0x2d8] sm:$0xff]
    %v1542 = vld [vmem:[%s11 + $0x2e0] sm:$0xff]
    %v1543 = vld [vmem:[%s11 + $0x2e8] sm:$0xff]
    %v1544 = vld [vmem:[%s11 + $0x2f0] sm:$0xf]
    %v1545 = vld [vmem:[%s11 + $0x2f4] sm:$0xff]
    %v1546 = vld [vmem:[%s11 + $0x2fc] sm:$0xff]
    %v1547 = vld [vmem:[%s11 + $0x304] sm:$0xff]
    %v1548 = vld [vmem:[%s11 + $0x30c] sm:$0xf]
    %v1549 = vld [vmem:[%s11 + $0x310] sm:$0xff]
    %v1550 = vld [vmem:[%s11 + $0x318] sm:$0xff]
    %v1551 = vld [vmem:[%s11 + $0x320] sm:$0xff]
    %v1552 = vld [vmem:[%s11 + $0x328] sm:$0xf]
    %v1553 = vld [vmem:[%s11 + $0x32c] sm:$0xff]
    %v1554 = vld [vmem:[%s11 + $0x334] sm:$0xff]
    %v1555 = vld [vmem:[%s11 + $0x33c] sm:$0xff]
    %v1556 = vld [vmem:[%s11 + $0x344] sm:$0xf]
    %v1557 = vld [vmem:[%s11 + $0x348] sm:$0xff]
    %v1558 = vld [vmem:[%s11 + $0x350] sm:$0xff]
    %v1559 = vld [vmem:[%s11 + $0x358] sm:$0xff]
    %v1560 = vld [vmem:[%s11 + $0x360] sm:$0xf]
    %v1561 = vld [vmem:[%s11 + $0x364] sm:$0xff]
    %v1562 = vld [vmem:[%s11 + $0x36c] sm:$0xff]
    %v1563 = vld [vmem:[%s11 + $0x374] sm:$0xff]
    %v1564 = vld [vmem:[%s11 + $0x37c] sm:$0xf]
    %v1565 = vld [vmem:[%s12] sm:$0x7f]
    %v1567 = vlaneseq
    %v1568 = vshrl.u32 %v1567, 7
    %v1569 = vsub.s32 0, %v1568
    %v1570 = vrot.slane %v1565, %v1569
    %v1571 = vlaneseq
    %v1572 = vshrl.u32 %v1571, 7
    %v1573 = vsub.s32 1, %v1572
    %v1574 = vrot.slane %v1565, %v1573
    %v1575 = vlaneseq
    %v1576 = vshrl.u32 %v1575, 7
    %v1577 = vsub.s32 2, %v1576
    %v1578 = vrot.slane %v1565, %v1577
    %v1579 = vlaneseq
    %v1580 = vshrl.u32 %v1579, 7
    %v1581 = vsub.s32 3, %v1580
    %v1582 = vrot.slane %v1565, %v1581
    %v1583 = vlaneseq
    %v1584 = vshrl.u32 %v1583, 7
    %v1585 = vsub.s32 4, %v1584
    %v1586 = vrot.slane %v1565, %v1585
    %v1587 = vlaneseq
    %v1588 = vshrl.u32 %v1587, 7
    %v1589 = vsub.s32 5, %v1588
    %v1590 = vrot.slane %v1565, %v1589
    %v1591 = vlaneseq
    %v1592 = vshrl.u32 %v1591, 7
    %v1593 = vsub.s32 6, %v1592
    %v1594 = vrot.slane %v1565, %v1593
    %v1730 = vunpack.c.l.b16 %v1437
    %v1731 = vunpack.c.h.b16 %v1437
    %v1732 = vunpack.c.l.b16 %v1438
    %v1733 = vunpack.c.h.b16 %v1438
    %v1734 = vunpack.c.l.b16 %v1439
    %v1735 = vunpack.c.h.b16 %v1439
    %v1736 = vunpack.c.l.b16 %v1440
    %v1737 = vunpack.c.l.b16 %v1441
    %v1738 = vunpack.c.h.b16 %v1441
    %v1739 = vunpack.c.l.b16 %v1442
    %v1740 = vunpack.c.h.b16 %v1442
    %v1741 = vunpack.c.l.b16 %v1443
    %v1742 = vunpack.c.h.b16 %v1443
    %v1743 = vunpack.c.l.b16 %v1444
    %v1744 = vunpack.c.l.b16 %v1445
    %v1745 = vunpack.c.h.b16 %v1445
    %v1746 = vunpack.c.l.b16 %v1446
    %v1747 = vunpack.c.h.b16 %v1446
    %v1748 = vunpack.c.l.b16 %v1447
    %v1749 = vunpack.c.h.b16 %v1447
    %v1750 = vunpack.c.l.b16 %v1448
    %v1751 = vunpack.c.l.b16 %v1449
    %v1752 = vunpack.c.h.b16 %v1449
    %v1753 = vunpack.c.l.b16 %v1450
    %v1754 = vunpack.c.h.b16 %v1450
    %v1755 = vunpack.c.l.b16 %v1451
    %v1756 = vunpack.c.h.b16 %v1451
    %v1757 = vunpack.c.l.b16 %v1452
    %v1758 = vunpack.c.l.b16 %v1453
    %v1759 = vunpack.c.h.b16 %v1453
    %v1760 = vunpack.c.l.b16 %v1454
    %v1761 = vunpack.c.h.b16 %v1454
    %v1762 = vunpack.c.l.b16 %v1455
    %v1763 = vunpack.c.h.b16 %v1455
    %v1764 = vunpack.c.l.b16 %v1456
    %v1765 = vunpack.c.l.b16 %v1457
    %v1766 = vunpack.c.h.b16 %v1457
    %v1767 = vunpack.c.l.b16 %v1458
    %v1768 = vunpack.c.h.b16 %v1458
    %v1769 = vunpack.c.l.b16 %v1459
    %v1770 = vunpack.c.h.b16 %v1459
    %v1771 = vunpack.c.l.b16 %v1460
    %v1772 = vunpack.c.l.b16 %v1461
    %v1773 = vunpack.c.h.b16 %v1461
    %v1774 = vunpack.c.l.b16 %v1462
    %v1775 = vunpack.c.h.b16 %v1462
    %v1776 = vunpack.c.l.b16 %v1463
    %v1777 = vunpack.c.h.b16 %v1463
    %v1778 = vunpack.c.l.b16 %v1464
    %v1779 = vunpack.c.l.b16 %v1465
    %v1780 = vunpack.c.h.b16 %v1465
    %v1781 = vunpack.c.l.b16 %v1466
    %v1782 = vunpack.c.h.b16 %v1466
    %v1783 = vunpack.c.l.b16 %v1467
    %v1784 = vunpack.c.h.b16 %v1467
    %v1785 = vunpack.c.l.b16 %v1468
    %v1786 = vunpack.c.l.b16 %v1469
    %v1787 = vunpack.c.h.b16 %v1469
    %v1788 = vunpack.c.l.b16 %v1470
    %v1789 = vunpack.c.h.b16 %v1470
    %v1790 = vunpack.c.l.b16 %v1471
    %v1791 = vunpack.c.h.b16 %v1471
    %v1792 = vunpack.c.l.b16 %v1472
    %v1793 = vunpack.c.l.b16 %v1473
    %v1794 = vunpack.c.h.b16 %v1473
    %v1795 = vunpack.c.l.b16 %v1474
    %v1796 = vunpack.c.h.b16 %v1474
    %v1797 = vunpack.c.l.b16 %v1475
    %v1798 = vunpack.c.h.b16 %v1475
    %v1799 = vunpack.c.l.b16 %v1476
    %v1800 = vunpack.c.l.b16 %v1477
    %v1801 = vunpack.c.h.b16 %v1477
    %v1802 = vunpack.c.l.b16 %v1478
    %v1803 = vunpack.c.h.b16 %v1478
    %v1804 = vunpack.c.l.b16 %v1479
    %v1805 = vunpack.c.h.b16 %v1479
    %v1806 = vunpack.c.l.b16 %v1480
    %v1807 = vunpack.c.l.b16 %v1481
    %v1808 = vunpack.c.h.b16 %v1481
    %v1809 = vunpack.c.l.b16 %v1482
    %v1810 = vunpack.c.h.b16 %v1482
    %v1811 = vunpack.c.l.b16 %v1483
    %v1812 = vunpack.c.h.b16 %v1483
    %v1813 = vunpack.c.l.b16 %v1484
    %v1814 = vunpack.c.l.b16 %v1485
    %v1815 = vunpack.c.h.b16 %v1485
    %v1816 = vunpack.c.l.b16 %v1486
    %v1817 = vunpack.c.h.b16 %v1486
    %v1818 = vunpack.c.l.b16 %v1487
    %v1819 = vunpack.c.h.b16 %v1487
    %v1820 = vunpack.c.l.b16 %v1488
    %v1821 = vunpack.c.l.b16 %v1489
    %v1822 = vunpack.c.h.b16 %v1489
    %v1823 = vunpack.c.l.b16 %v1490
    %v1824 = vunpack.c.h.b16 %v1490
    %v1825 = vunpack.c.l.b16 %v1491
    %v1826 = vunpack.c.h.b16 %v1491
    %v1827 = vunpack.c.l.b16 %v1492
    %v1828 = vunpack.c.l.b16 %v1493
    %v1829 = vunpack.c.h.b16 %v1493
    %v1830 = vunpack.c.l.b16 %v1494
    %v1831 = vunpack.c.h.b16 %v1494
    %v1832 = vunpack.c.l.b16 %v1495
    %v1833 = vunpack.c.h.b16 %v1495
    %v1834 = vunpack.c.l.b16 %v1496
    %v1835 = vunpack.c.l.b16 %v1497
    %v1836 = vunpack.c.h.b16 %v1497
    %v1837 = vunpack.c.l.b16 %v1498
    %v1838 = vunpack.c.h.b16 %v1498
    %v1839 = vunpack.c.l.b16 %v1499
    %v1840 = vunpack.c.h.b16 %v1499
    %v1841 = vunpack.c.l.b16 %v1500
    %v1842 = vunpack.c.l.b16 %v1501
    %v1843 = vunpack.c.h.b16 %v1501
    %v1844 = vunpack.c.l.b16 %v1502
    %v1845 = vunpack.c.h.b16 %v1502
    %v1846 = vunpack.c.l.b16 %v1503
    %v1847 = vunpack.c.h.b16 %v1503
    %v1848 = vunpack.c.l.b16 %v1504
    %v1849 = vunpack.c.l.b16 %v1505
    %v1850 = vunpack.c.h.b16 %v1505
    %v1851 = vunpack.c.l.b16 %v1506
    %v1852 = vunpack.c.h.b16 %v1506
    %v1853 = vunpack.c.l.b16 %v1507
    %v1854 = vunpack.c.h.b16 %v1507
    %v1855 = vunpack.c.l.b16 %v1508
    %v1856 = vunpack.c.l.b16 %v1509
    %v1857 = vunpack.c.h.b16 %v1509
    %v1858 = vunpack.c.l.b16 %v1510
    %v1859 = vunpack.c.h.b16 %v1510
    %v1860 = vunpack.c.l.b16 %v1511
    %v1861 = vunpack.c.h.b16 %v1511
    %v1862 = vunpack.c.l.b16 %v1512
    %v1863 = vunpack.c.l.b16 %v1513
    %v1864 = vunpack.c.h.b16 %v1513
    %v1865 = vunpack.c.l.b16 %v1514
    %v1866 = vunpack.c.h.b16 %v1514
    %v1867 = vunpack.c.l.b16 %v1515
    %v1868 = vunpack.c.h.b16 %v1515
    %v1869 = vunpack.c.l.b16 %v1516
    %v1870 = vunpack.c.l.b16 %v1517
    %v1871 = vunpack.c.h.b16 %v1517
    %v1872 = vunpack.c.l.b16 %v1518
    %v1873 = vunpack.c.h.b16 %v1518
    %v1874 = vunpack.c.l.b16 %v1519
    %v1875 = vunpack.c.h.b16 %v1519
    %v1876 = vunpack.c.l.b16 %v1520
    %v1877 = vunpack.c.l.b16 %v1521
    %v1878 = vunpack.c.h.b16 %v1521
    %v1879 = vunpack.c.l.b16 %v1522
    %v1880 = vunpack.c.h.b16 %v1522
    %v1881 = vunpack.c.l.b16 %v1523
    %v1882 = vunpack.c.h.b16 %v1523
    %v1883 = vunpack.c.l.b16 %v1524
    %v1884 = vunpack.c.l.b16 %v1525
    %v1885 = vunpack.c.h.b16 %v1525
    %v1886 = vunpack.c.l.b16 %v1526
    %v1887 = vunpack.c.h.b16 %v1526
    %v1888 = vunpack.c.l.b16 %v1527
    %v1889 = vunpack.c.h.b16 %v1527
    %v1890 = vunpack.c.l.b16 %v1528
    %v1891 = vunpack.c.l.b16 %v1529
    %v1892 = vunpack.c.h.b16 %v1529
    %v1893 = vunpack.c.l.b16 %v1530
    %v1894 = vunpack.c.h.b16 %v1530
    %v1895 = vunpack.c.l.b16 %v1531
    %v1896 = vunpack.c.h.b16 %v1531
    %v1897 = vunpack.c.l.b16 %v1532
    %v1898 = vunpack.c.l.b16 %v1533
    %v1899 = vunpack.c.h.b16 %v1533
    %v1900 = vunpack.c.l.b16 %v1534
    %v1901 = vunpack.c.h.b16 %v1534
    %v1902 = vunpack.c.l.b16 %v1535
    %v1903 = vunpack.c.h.b16 %v1535
    %v1904 = vunpack.c.l.b16 %v1536
    %v1905 = vunpack.c.l.b16 %v1537
    %v1906 = vunpack.c.h.b16 %v1537
    %v1907 = vunpack.c.l.b16 %v1538
    %v1908 = vunpack.c.h.b16 %v1538
    %v1909 = vunpack.c.l.b16 %v1539
    %v1910 = vunpack.c.h.b16 %v1539
    %v1911 = vunpack.c.l.b16 %v1540
    %v1912 = vunpack.c.l.b16 %v1541
    %v1913 = vunpack.c.h.b16 %v1541
    %v1914 = vunpack.c.l.b16 %v1542
    %v1915 = vunpack.c.h.b16 %v1542
    %v1916 = vunpack.c.l.b16 %v1543
    %v1917 = vunpack.c.h.b16 %v1543
    %v1918 = vunpack.c.l.b16 %v1544
    %v1919 = vunpack.c.l.b16 %v1545
    %v1920 = vunpack.c.h.b16 %v1545
    %v1921 = vunpack.c.l.b16 %v1546
    %v1922 = vunpack.c.h.b16 %v1546
    %v1923 = vunpack.c.l.b16 %v1547
    %v1924 = vunpack.c.h.b16 %v1547
    %v1925 = vunpack.c.l.b16 %v1548
    %v1926 = vunpack.c.l.b16 %v1549
    %v1927 = vunpack.c.h.b16 %v1549
    %v1928 = vunpack.c.l.b16 %v1550
    %v1929 = vunpack.c.h.b16 %v1550
    %v1930 = vunpack.c.l.b16 %v1551
    %v1931 = vunpack.c.h.b16 %v1551
    %v1932 = vunpack.c.l.b16 %v1552
    %v1933 = vunpack.c.l.b16 %v1553
    %v1934 = vunpack.c.h.b16 %v1553
    %v1935 = vunpack.c.l.b16 %v1554
    %v1936 = vunpack.c.h.b16 %v1554
    %v1937 = vunpack.c.l.b16 %v1555
    %v1938 = vunpack.c.h.b16 %v1555
    %v1939 = vunpack.c.l.b16 %v1556
    %v1940 = vunpack.c.l.b16 %v1557
    %v1941 = vunpack.c.h.b16 %v1557
    %v1942 = vunpack.c.l.b16 %v1558
    %v1943 = vunpack.c.h.b16 %v1558
    %v1944 = vunpack.c.l.b16 %v1559
    %v1945 = vunpack.c.h.b16 %v1559
    %v1946 = vunpack.c.l.b16 %v1560
    %v1947 = vunpack.c.l.b16 %v1561
    %v1948 = vunpack.c.h.b16 %v1561
    %v1949 = vunpack.c.l.b16 %v1562
    %v1950 = vunpack.c.h.b16 %v1562
    %v1951 = vunpack.c.l.b16 %v1563
    %v1952 = vunpack.c.h.b16 %v1563
    %v1953 = vunpack.c.l.b16 %v1564
    %v1954 = vpack.c.b16 %v1737, %v1730
    %v1955 = vpack.c.b16 %v1738, %v1731
    %v1956 = vpack.c.b16 %v1739, %v1732
    %v1957 = vpack.c.b16 %v1740, %v1733
    %v1958 = vpack.c.b16 %v1741, %v1734
    %v1959 = vpack.c.b16 %v1742, %v1735
    %v1960 = vpack.c.b16 %v1743, %v1736
    %v1961 = vpack.c.b16 %v1751, %v1744
    %v1962 = vpack.c.b16 %v1752, %v1745
    %v1963 = vpack.c.b16 %v1753, %v1746
    %v1964 = vpack.c.b16 %v1754, %v1747
    %v1965 = vpack.c.b16 %v1755, %v1748
    %v1966 = vpack.c.b16 %v1756, %v1749
    %v1967 = vpack.c.b16 %v1757, %v1750
    %v1968 = vpack.c.b16 %v1765, %v1758
    %v1969 = vpack.c.b16 %v1766, %v1759
    %v1970 = vpack.c.b16 %v1767, %v1760
    %v1971 = vpack.c.b16 %v1768, %v1761
    %v1972 = vpack.c.b16 %v1769, %v1762
    %v1973 = vpack.c.b16 %v1770, %v1763
    %v1974 = vpack.c.b16 %v1771, %v1764
    %v1975 = vpack.c.b16 %v1779, %v1772
    %v1976 = vpack.c.b16 %v1780, %v1773
    %v1977 = vpack.c.b16 %v1781, %v1774
    %v1978 = vpack.c.b16 %v1782, %v1775
    %v1979 = vpack.c.b16 %v1783, %v1776
    %v1980 = vpack.c.b16 %v1784, %v1777
    %v1981 = vpack.c.b16 %v1785, %v1778
    %v1982 = vpack.c.b16 %v1793, %v1786
    %v1983 = vpack.c.b16 %v1794, %v1787
    %v1984 = vpack.c.b16 %v1795, %v1788
    %v1985 = vpack.c.b16 %v1796, %v1789
    %v1986 = vpack.c.b16 %v1797, %v1790
    %v1987 = vpack.c.b16 %v1798, %v1791
    %v1988 = vpack.c.b16 %v1799, %v1792
    %v1989 = vpack.c.b16 %v1807, %v1800
    %v1990 = vpack.c.b16 %v1808, %v1801
    %v1991 = vpack.c.b16 %v1809, %v1802
    %v1992 = vpack.c.b16 %v1810, %v1803
    %v1993 = vpack.c.b16 %v1811, %v1804
    %v1994 = vpack.c.b16 %v1812, %v1805
    %v1995 = vpack.c.b16 %v1813, %v1806
    %v1996 = vpack.c.b16 %v1821, %v1814
    %v1997 = vpack.c.b16 %v1822, %v1815
    %v1998 = vpack.c.b16 %v1823, %v1816
    %v1999 = vpack.c.b16 %v1824, %v1817
    %v2000 = vpack.c.b16 %v1825, %v1818
    %v2001 = vpack.c.b16 %v1826, %v1819
    %v2002 = vpack.c.b16 %v1827, %v1820
    %v2003 = vpack.c.b16 %v1835, %v1828
    %v2004 = vpack.c.b16 %v1836, %v1829
    %v2005 = vpack.c.b16 %v1837, %v1830
    %v2006 = vpack.c.b16 %v1838, %v1831
    %v2007 = vpack.c.b16 %v1839, %v1832
    %v2008 = vpack.c.b16 %v1840, %v1833
    %v2009 = vpack.c.b16 %v1841, %v1834
    %v2010 = vpack.c.b16 %v1849, %v1842
    %v2011 = vpack.c.b16 %v1850, %v1843
    %v2012 = vpack.c.b16 %v1851, %v1844
    %v2013 = vpack.c.b16 %v1852, %v1845
    %v2014 = vpack.c.b16 %v1853, %v1846
    %v2015 = vpack.c.b16 %v1854, %v1847
    %v2016 = vpack.c.b16 %v1855, %v1848
    %v2017 = vpack.c.b16 %v1863, %v1856
    %v2018 = vpack.c.b16 %v1864, %v1857
    %v2019 = vpack.c.b16 %v1865, %v1858
    %v2020 = vpack.c.b16 %v1866, %v1859
    %v2021 = vpack.c.b16 %v1867, %v1860
    %v2022 = vpack.c.b16 %v1868, %v1861
    %v2023 = vpack.c.b16 %v1869, %v1862
    %v2024 = vpack.c.b16 %v1877, %v1870
    %v2025 = vpack.c.b16 %v1878, %v1871
    %v2026 = vpack.c.b16 %v1879, %v1872
    %v2027 = vpack.c.b16 %v1880, %v1873
    %v2028 = vpack.c.b16 %v1881, %v1874
    %v2029 = vpack.c.b16 %v1882, %v1875
    %v2030 = vpack.c.b16 %v1883, %v1876
    %v2031 = vpack.c.b16 %v1891, %v1884
    %v2032 = vpack.c.b16 %v1892, %v1885
    %v2033 = vpack.c.b16 %v1893, %v1886
    %v2034 = vpack.c.b16 %v1894, %v1887
    %v2035 = vpack.c.b16 %v1895, %v1888
    %v2036 = vpack.c.b16 %v1896, %v1889
    %v2037 = vpack.c.b16 %v1897, %v1890
    %v2038 = vpack.c.b16 %v1905, %v1898
    %v2039 = vpack.c.b16 %v1906, %v1899
    %v2040 = vpack.c.b16 %v1907, %v1900
    %v2041 = vpack.c.b16 %v1908, %v1901
    %v2042 = vpack.c.b16 %v1909, %v1902
    %v2043 = vpack.c.b16 %v1910, %v1903
    %v2044 = vpack.c.b16 %v1911, %v1904
    %v2045 = vpack.c.b16 %v1919, %v1912
    %v2046 = vpack.c.b16 %v1920, %v1913
    %v2047 = vpack.c.b16 %v1921, %v1914
    %v2048 = vpack.c.b16 %v1922, %v1915
    %v2049 = vpack.c.b16 %v1923, %v1916
    %v2050 = vpack.c.b16 %v1924, %v1917
    %v2051 = vpack.c.b16 %v1925, %v1918
    %v2052 = vpack.c.b16 %v1933, %v1926
    %v2053 = vpack.c.b16 %v1934, %v1927
    %v2054 = vpack.c.b16 %v1935, %v1928
    %v2055 = vpack.c.b16 %v1936, %v1929
    %v2056 = vpack.c.b16 %v1937, %v1930
    %v2057 = vpack.c.b16 %v1938, %v1931
    %v2058 = vpack.c.b16 %v1939, %v1932
    %v2059 = vpack.c.b16 %v1947, %v1940
    %v2060 = vpack.c.b16 %v1948, %v1941
    %v2061 = vpack.c.b16 %v1949, %v1942
    %v2062 = vpack.c.b16 %v1950, %v1943
    %v2063 = vpack.c.b16 %v1951, %v1944
    %v2064 = vpack.c.b16 %v1952, %v1945
    %v2065 = vpack.c.b16 %v1953, %v1946
    %2178 = vmatprep.subr.bf16.mxu0 %v1955
    %2179 = vmatpush1.bf16.msra.mxu0 %v1954
    %2180 = vmatprep.subr.bf16.mxu0 %v1962
    %2181 = vmatpush1.bf16.msra.mxu0 %v1961
    %2182 = vmatprep.subr.bf16.mxu0 %v1969
    %2183 = vmatpush1.bf16.msra.mxu0 %v1968
    %2184 = vmatprep.subr.bf16.mxu0 %v1976
    %2185 = vmatpush1.bf16.msra.mxu0 %v1975
    %2186 = vmatprep.subr.bf16.mxu0 %v1983
    %2187 = vmatpush1.bf16.msra.mxu0 %v1982
    %2188 = vmatprep.subr.bf16.mxu0 %v1990
    %2189 = vmatpush1.bf16.msra.mxu0 %v1989
    %2190 = vmatprep.subr.bf16.mxu0 %v1997
    %2191 = vmatpush1.bf16.msra.mxu0 %v1996
    %2192 = vmatprep.subr.bf16.mxu0 %v2004
    %2193 = vmatpush1.bf16.msra.mxu0 %v2003
    %2194 = vmatprep.subr.bf16.mxu0 %v2011
    %2195 = vmatpush1.bf16.msra.mxu0 %v2010
    %2196 = vmatprep.subr.bf16.mxu0 %v2018
    %2197 = vmatpush1.bf16.msra.mxu0 %v2017
    %2198 = vmatprep.subr.bf16.mxu0 %v2025
    %2199 = vmatpush1.bf16.msra.mxu0 %v2024
    %2200 = vmatprep.subr.bf16.mxu0 %v2032
    %2201 = vmatpush1.bf16.msra.mxu0 %v2031
    %2202 = vmatprep.subr.bf16.mxu0 %v2039
    %2203 = vmatpush1.bf16.msra.mxu0 %v2038
    %2204 = vmatprep.subr.bf16.mxu0 %v2046
    %2205 = vmatpush1.bf16.msra.mxu0 %v2045
    %2206 = vmatprep.subr.bf16.mxu0 %v2053
    %2207 = vmatpush1.bf16.msra.mxu0 %v2052
    %2208 = vmatprep.subr.bf16.mxu0 %v2060
    %2209 = vmatpush1.bf16.msra.mxu0 %v2059
    %2210 = vmatprep.mubr.bf16.mxu0 %v1436
    %2211 = vmatmul.mubr.bf16.gmra.mrb[0].mxu0 %v1435
    %v2212 = vpop.f32.mrb[0].mxu0
    %v2213 = vadd.f32 %v1570, %v2212
    %v2214 = vpop.f32.mrb[0].mxu0
    %v2215 = vadd.f32 %v1574, %v2214
    %v2216 = vpop.f32.mrb[0].mxu0
    %v2217 = vadd.f32 %v1570, %v2216
    %v2218 = vpop.f32.mrb[0].mxu0
    %v2219 = vadd.f32 %v1574, %v2218
    %2220 = vdwg.mxu0
    %2221 = vmatprep.subr.bf16.mxu0 %v1957
    %2222 = vmatpush1.bf16.msra.mxu0 %v1956
    %2223 = vmatprep.subr.bf16.mxu0 %v1964
    %2224 = vmatpush1.bf16.msra.mxu0 %v1963
    %2225 = vmatprep.subr.bf16.mxu0 %v1971
    %2226 = vmatpush1.bf16.msra.mxu0 %v1970
    %2227 = vmatprep.subr.bf16.mxu0 %v1978
    %2228 = vmatpush1.bf16.msra.mxu0 %v1977
    %2229 = vmatprep.subr.bf16.mxu0 %v1985
    %2230 = vmatpush1.bf16.msra.mxu0 %v1984
    %2231 = vmatprep.subr.bf16.mxu0 %v1992
    %2232 = vmatpush1.bf16.msra.mxu0 %v1991
    %2233 = vmatprep.subr.bf16.mxu0 %v1999
    %2234 = vmatpush1.bf16.msra.mxu0 %v1998
    %2235 = vmatprep.subr.bf16.mxu0 %v2006
    %2236 = vmatpush1.bf16.msra.mxu0 %v2005
    %2237 = vmatprep.subr.bf16.mxu0 %v2013
    %2238 = vmatpush1.bf16.msra.mxu0 %v2012
    %2239 = vmatprep.subr.bf16.mxu0 %v2020
    %2240 = vmatpush1.bf16.msra.mxu0 %v2019
    %2241 = vmatprep.subr.bf16.mxu0 %v2027
    %2242 = vmatpush1.bf16.msra.mxu0 %v2026
    %2243 = vmatprep.subr.bf16.mxu0 %v2034
    %2244 = vmatpush1.bf16.msra.mxu0 %v2033
    %2245 = vmatprep.subr.bf16.mxu0 %v2041
    %2246 = vmatpush1.bf16.msra.mxu0 %v2040
    %2247 = vmatprep.subr.bf16.mxu0 %v2048
    %2248 = vmatpush1.bf16.msra.mxu0 %v2047
    %2249 = vmatprep.subr.bf16.mxu0 %v2055
    %2250 = vmatpush1.bf16.msra.mxu0 %v2054
    %2251 = vmatprep.subr.bf16.mxu0 %v2062
    %2252 = vmatpush1.bf16.msra.mxu0 %v2061
    %2253 = vmatprep.mubr.bf16.mxu0 %v1436
    %2254 = vmatmul.mubr.bf16.gmra.mrb[0].mxu0 %v1435
    %v2255 = vpop.f32.mrb[0].mxu0
    %v2256 = vadd.f32 %v1578, %v2255
    %v2257 = vpop.f32.mrb[0].mxu0
    %v2258 = vadd.f32 %v1582, %v2257
    %v2259 = vpop.f32.mrb[0].mxu0
    %v2260 = vadd.f32 %v1578, %v2259
    %v2261 = vpop.f32.mrb[0].mxu0
    %v2262 = vadd.f32 %v1582, %v2261
    %2263 = vdwg.mxu0
    %2264 = vmatprep.subr.bf16.mxu0 %v1959
    %2265 = vmatpush1.bf16.msra.mxu0 %v1958
    %2266 = vmatprep.subr.bf16.mxu0 %v1966
    %2267 = vmatpush1.bf16.msra.mxu0 %v1965
    %2268 = vmatprep.subr.bf16.mxu0 %v1973
    %2269 = vmatpush1.bf16.msra.mxu0 %v1972
    %2270 = vmatprep.subr.bf16.mxu0 %v1980
    %2271 = vmatpush1.bf16.msra.mxu0 %v1979
    %2272 = vmatprep.subr.bf16.mxu0 %v1987
    %2273 = vmatpush1.bf16.msra.mxu0 %v1986
    %2274 = vmatprep.subr.bf16.mxu0 %v1994
    %2275 = vmatpush1.bf16.msra.mxu0 %v1993
    %2276 = vmatprep.subr.bf16.mxu0 %v2001
    %2277 = vmatpush1.bf16.msra.mxu0 %v2000
    %2278 = vmatprep.subr.bf16.mxu0 %v2008
    %2279 = vmatpush1.bf16.msra.mxu0 %v2007
    %2280 = vmatprep.subr.bf16.mxu0 %v2015
    %2281 = vmatpush1.bf16.msra.mxu0 %v2014
    %2282 = vmatprep.subr.bf16.mxu0 %v2022
    %2283 = vmatpush1.bf16.msra.mxu0 %v2021
    %2284 = vmatprep.subr.bf16.mxu0 %v2029
    %2285 = vmatpush1.bf16.msra.mxu0 %v2028
    %2286 = vmatprep.subr.bf16.mxu0 %v2036
    %2287 = vmatpush1.bf16.msra.mxu0 %v2035
    %2288 = vmatprep.subr.bf16.mxu0 %v2043
    %2289 = vmatpush1.bf16.msra.mxu0 %v2042
    %2290 = vmatprep.subr.bf16.mxu0 %v2050
    %2291 = vmatpush1.bf16.msra.mxu0 %v2049
    %2292 = vmatprep.subr.bf16.mxu0 %v2057
    %2293 = vmatpush1.bf16.msra.mxu0 %v2056
    %2294 = vmatprep.subr.bf16.mxu0 %v2064
    %2295 = vmatpush1.bf16.msra.mxu0 %v2063
    %2296 = vmatprep.mubr.bf16.mxu0 %v1436
    %2297 = vmatmul.mubr.bf16.gmra.mrb[0].mxu0 %v1435
    %v2298 = vpop.f32.mrb[0].mxu0
    %v2299 = vadd.f32 %v1586, %v2298
    %v2300 = vpop.f32.mrb[0].mxu0
    %v2301 = vadd.f32 %v1590, %v2300
    %v2302 = vpop.f32.mrb[0].mxu0
    %v2303 = vadd.f32 %v1586, %v2302
    %v2304 = vpop.f32.mrb[0].mxu0
    %v2305 = vadd.f32 %v1590, %v2304
    %2306 = vdwg.mxu0
    %2307 = vmatprep.subr.bf16.mxu0 0
    %2308 = vmatpush1.bf16.msra.mxu0 %v1960
    %2309 = vmatprep.subr.bf16.mxu0 0
    %2310 = vmatpush1.bf16.msra.mxu0 %v1967
    %2311 = vmatprep.subr.bf16.mxu0 0
    %2312 = vmatpush1.bf16.msra.mxu0 %v1974
    %2313 = vmatprep.subr.bf16.mxu0 0
    %2314 = vmatpush1.bf16.msra.mxu0 %v1981
    %2315 = vmatprep.subr.bf16.mxu0 0
    %2316 = vmatpush1.bf16.msra.mxu0 %v1988
    %2317 = vmatprep.subr.bf16.mxu0 0
    %2318 = vmatpush1.bf16.msra.mxu0 %v1995
    %2319 = vmatprep.subr.bf16.mxu0 0
    %2320 = vmatpush1.bf16.msra.mxu0 %v2002
    %2321 = vmatprep.subr.bf16.mxu0 0
    %2322 = vmatpush1.bf16.msra.mxu0 %v2009
    %2323 = vmatprep.subr.bf16.mxu0 0
    %2324 = vmatpush1.bf16.msra.mxu0 %v2016
    %2325 = vmatprep.subr.bf16.mxu0 0
    %2326 = vmatpush1.bf16.msra.mxu0 %v2023
    %2327 = vmatprep.subr.bf16.mxu0 0
    %2328 = vmatpush1.bf16.msra.mxu0 %v2030
    %2329 = vmatprep.subr.bf16.mxu0 0
    %2330 = vmatpush1.bf16.msra.mxu0 %v2037
    %2331 = vmatprep.subr.bf16.mxu0 0
    %2332 = vmatpush1.bf16.msra.mxu0 %v2044
    %2333 = vmatprep.subr.bf16.mxu0 0
    %2334 = vmatpush1.bf16.msra.mxu0 %v2051
    %2335 = vmatprep.subr.bf16.mxu0 0
    %2336 = vmatpush1.bf16.msra.mxu0 %v2058
    %2337 = vmatprep.subr.bf16.mxu0 0
    %2338 = vmatpush1.bf16.msra.mxu0 %v2065
    %2339 = vmatprep.mubr.bf16.mxu0 %v1436
    %2340 = vmatmul.mubr.bf16.gmra.mrb[0].mxu0 %v1435
    %v2341 = vpop.f32.mrb[0].mxu0
    %v2342 = vadd.f32 %v1594, %v2341
    %v2343 = vpop.f32.mrb[0].mxu0
    %v2344 = vpop.f32.mrb[0].mxu0
    %v2345 = vadd.f32 %v1594, %v2344
    %v2346 = vpop.f32.mrb[0].mxu0
    %2347 = vdwg.mxu0
    %v2348 = vxor.u32 %v2213, 2147483648
    %v2349 = vxor.u32 %v2215, 2147483648
    %v2350 = vxor.u32 %v2256, 2147483648
    %v2351 = vxor.u32 %v2258, 2147483648
    %v2352 = vxor.u32 %v2299, 2147483648
    %v2353 = vxor.u32 %v2301, 2147483648
    %v2354 = vxor.u32 %v2342, 2147483648
    %v2355 = vxor.u32 %v2217, 2147483648
    %v2356 = vxor.u32 %v2219, 2147483648
    %v2357 = vxor.u32 %v2260, 2147483648
    %v2358 = vxor.u32 %v2262, 2147483648
    %v2359 = vxor.u32 %v2303, 2147483648
    %v2360 = vxor.u32 %v2305, 2147483648
    %v2361 = vxor.u32 %v2345, 2147483648
    %v2362 = vmul.f32 %v2348, 1.442695
    %v2363 = vpow.pop %v2362
    %v2364 = vmul.f32 %v2349, 1.442695
    %v2365 = vpow.pop %v2364
    %v2366 = vmul.f32 %v2350, 1.442695
    %v2367 = vpow.pop %v2366
    %v2368 = vmul.f32 %v2351, 1.442695
    %v2369 = vpow.pop %v2368
    %v2370 = vmul.f32 %v2352, 1.442695
    %v2371 = vpow.pop %v2370
    %v2372 = vmul.f32 %v2353, 1.442695
    %v2373 = vpow.pop %v2372
    %v2374 = vmul.f32 %v2354, 1.442695
    %v2375 = vpow.pop %v2374
    %v2376 = vmul.f32 %v2355, 1.442695
    %v2377 = vpow.pop %v2376
    %v2378 = vmul.f32 %v2356, 1.442695
    %v2379 = vpow.pop %v2378
    %v2380 = vmul.f32 %v2357, 1.442695
    %v2381 = vpow.pop %v2380
    %v2382 = vmul.f32 %v2358, 1.442695
    %v2383 = vpow.pop %v2382
    %v2384 = vmul.f32 %v2359, 1.442695
    %v2385 = vpow.pop %v2384
    %v2386 = vmul.f32 %v2360, 1.442695
    %v2387 = vpow.pop %v2386
    %v2388 = vmul.f32 %v2361, 1.442695
    %v2389 = vpow.pop %v2388
    %v2390 = vadd.f32 %v2363, 1.0
    %v2391 = vadd.f32 %v2365, 1.0
    %v2392 = vadd.f32 %v2367, 1.0
    %v2393 = vadd.f32 %v2369, 1.0
    %v2394 = vadd.f32 %v2371, 1.0
    %v2395 = vadd.f32 %v2373, 1.0
    %v2396 = vadd.f32 %v2375, 1.0
    %v2397 = vadd.f32 %v2377, 1.0
    %v2398 = vadd.f32 %v2379, 1.0
    %v2399 = vadd.f32 %v2381, 1.0
    %v2400 = vadd.f32 %v2383, 1.0
    %v2401 = vadd.f32 %v2385, 1.0
    %v2402 = vadd.f32 %v2387, 1.0
    %v2403 = vadd.f32 %v2389, 1.0
    %v2404 = vrcp.pop %v2390
    %v2405 = vmul.f32 1.0, %v2404
    %v2406 = vrcp.pop %v2391
    %v2407 = vmul.f32 1.0, %v2406
    %v2408 = vrcp.pop %v2392
    %v2409 = vmul.f32 1.0, %v2408
    %v2410 = vrcp.pop %v2393
    %v2411 = vmul.f32 1.0, %v2410
    %v2412 = vrcp.pop %v2394
    %v2413 = vmul.f32 1.0, %v2412
    %v2414 = vrcp.pop %v2395
    %v2415 = vmul.f32 1.0, %v2414
    %v2416 = vrcp.pop %v2396
    %v2417 = vmul.f32 1.0, %v2416
    %v2418 = vrcp.pop %v2397
    %v2419 = vmul.f32 1.0, %v2418
    %v2420 = vrcp.pop %v2398
    %v2421 = vmul.f32 1.0, %v2420
    %v2422 = vrcp.pop %v2399
    %v2423 = vmul.f32 1.0, %v2422
    %v2424 = vrcp.pop %v2400
    %v2425 = vmul.f32 1.0, %v2424
    %v2426 = vrcp.pop %v2401
    %v2427 = vmul.f32 1.0, %v2426
    %v2428 = vrcp.pop %v2402
    %v2429 = vmul.f32 1.0, %v2428
    %v2430 = vrcp.pop %v2403
    %v2431 = vmul.f32 1.0, %v2430
    %2432 = vst [vmem:[#allocation2] sm:$0xff] %v2405
    %2433 = vst [vmem:[#allocation2 + $0x8] sm:$0xff] %v2407
    %2434 = vst [vmem:[#allocation2 + $0x10] sm:$0xff] %v2409
    %2435 = vst [vmem:[#allocation2 + $0x18] sm:$0xff] %v2411
    %2436 = vst [vmem:[#allocation2 + $0x20] sm:$0xff] %v2413
    %2437 = vst [vmem:[#allocation2 + $0x28] sm:$0xff] %v2415
    %2438 = vst.msk [vmem:[#allocation2 + $0x30] sm:$0xff] %vm689, %v2417
    %2439 = vst [vmem:[#allocation2 + $0x38] sm:$0xff] %v2419
    %2440 = vst [vmem:[#allocation2 + $0x40] sm:$0xff] %v2421
    %2441 = vst [vmem:[#allocation2 + $0x48] sm:$0xff] %v2423
    %2442 = vst [vmem:[#allocation2 + $0x50] sm:$0xff] %v2425
    %2443 = vst [vmem:[#allocation2 + $0x58] sm:$0xff] %v2427
    %2444 = vst [vmem:[#allocation2 + $0x60] sm:$0xff] %v2429
    %2445 = vst.msk [vmem:[#allocation2 + $0x68] sm:$0xff] %vm689, %v2431
    // Predicated region
    $region54: #{tpu_custom_call.1} parent=1 // pred_check
      _
    $region55: #{tpu_custom_call.1} parent=1 // pred_check_branch
      %2447 = sbr.rel (0) target = $region57
    $region56: #{tpu_custom_call.1} parent=1 // pred_region
      %s2449 = ssub.s32 1792, 1792
      %2450 = vsyncadd [#allocation3], %s2449
      %s2451 = sshll.u32 [#allocation2], 4
      %s2452 = int_to_ptr.vmem [resolvable:$true] %s2451
      %2457 = dma.vmem_to_hbm [thread:$0]  %s2452, 1792, %s13, [#allocation3], 896, 896, 56
    $region57: #{tpu_custom_call.1} parent=1 // pred_fallthru
      _
    // Predicated region
    $region58: #{tpu_custom_call.1} parent=1 // pred_check
      _
    $region59: #{tpu_custom_call.1} parent=1 // pred_check_branch
      %2459 = sbr.rel (0) target = $region61
    $region60: #{tpu_custom_call.1} parent=1 // pred_region
      %2460 = dma.done [#allocation3], 1792
    $region61: #{tpu_custom_call.1} parent=1 // pred_fallthru
      _
    %2461 = vsyncpa [#allocation3], 1

</llo_original>
